<compile_context>
chip_gen: v7x
topology: tpu7x:2x2x1
jax: 0.10.0
libtpu: 0.0.40
codegen_flags: <defaults>
</compile_context>

<pallas_src>
import math

import jax
import jax.numpy as jnp
from jax.experimental import pallas as pl
from jax.experimental.pallas import tpu as pltpu

# ----------------------------------------------------------------------------
# Stand-in for plan2scene `param` config (small, but consistent with forward).
# ----------------------------------------------------------------------------
DIM = 2                  # param.dim (2-D position field)
OCTAVES = 4              # param.noise.octaves
TEX_CHANNELS = 4         # param.texture.channels
TEX_E = 8                # param.texture.e  (latent z channels)
TEX_T = DIM * DIM        # param.texture.t  (coordinate-transform coefficients)
IMAGE_RES = 16           # param.image.image_res
BOTTLENECK = 32          # encoder bottleneck size
N_SUBSTANCES = 4         # len(param.dataset.substances)
MLP_HIDDEN = 64          # decoder MLP hidden width
OUT_CHANNELS = 3         # synthesized RGB texture

OC = OCTAVES * TEX_CHANNELS      # noise (octave, channel) pairs = 16
CIN = TEX_E + 2 * OC             # decoder MLP input channels (torch view) = 40
TWO_PI = 2.0 * math.pi

# fc_final / substance head column offsets (fused head output row layout)
HEAD_Z = TEX_T                   # cols [0:4)=transform, [4:12)=z, [12:16)=substance
HEAD_SUB = TEX_T + TEX_E

# Per-sample aux row layout (built entirely inside the head kernel):
#   [0:64)    b1_eff  = dec_b1 + z @ dec_w1[:e, :]   (z folded into the MLP bias)
#   [64:80)   1.7 * seed                              (sin-row phase offsets)
#   [80:96)   2.3 * seed + pi/2                       (cos rows folded into sin)
#   [96:100)  coordinate-transform coefficients
#   [100:104) substance-classifier logits
#   [104:128) zero padding
AUX_ROWS = 128
AUX_B1 = 0
AUX_S = MLP_HIDDEN               # 64
AUX_T = AUX_S + 2 * OC           # 96
AUX_SUB = AUX_T + TEX_T          # 100


def _round_up(n, m):
    return ((n + m - 1) // m) * m


def _cdiv(a, b):
    return -(-a // b)


def _pad_to(x, rows, cols):
    r, c = x.shape
    return jnp.pad(x, ((0, rows - r), (0, cols - c)))


# ----------------------------------------------------------------------------
# Pallas kernel 1: fused encoder stand-in + fc_final + substance + aux builder.
# ----------------------------------------------------------------------------
def _head_stage(bn, seed_ref, wh_ref, bh_ref, w1z_ref, b1_ref, aux_ref):
    # head = bn @ [fc_final_w | substance_w] + [fc_final_b | substance_b]
    head = jnp.dot(bn.astype(jnp.bfloat16), wh_ref[...],
                   preferred_element_type=jnp.float32) + bh_ref[...]
    # Fold z into a per-sample effective first-layer bias for the decoder MLP.
    b1_eff = jnp.dot(head[:, HEAD_Z:HEAD_Z + TEX_E].astype(jnp.bfloat16),
                     w1z_ref[...],
                     preferred_element_type=jnp.float32) + b1_ref[...]
    seed = seed_ref[...]                                     # (bs_pad, OC) f32
    aux_ref[...] = jnp.zeros(aux_ref.shape, jnp.float32)
    aux_ref[:, AUX_B1:AUX_B1 + MLP_HIDDEN] = b1_eff
    aux_ref[:, AUX_S:AUX_S + OC] = 1.7 * seed
    aux_ref[:, AUX_S + OC:AUX_S + 2 * OC] = 2.3 * seed + (0.5 * math.pi)
    aux_ref[:, AUX_T:AUX_T + TEX_T] = head[:, 0:TEX_T]
    aux_ref[:, AUX_SUB:AUX_SUB + N_SUBSTANCES] = head[:, HEAD_SUB:HEAD_SUB + N_SUBSTANCES]


def _enc_head_kernel(img_ref, seed_ref, we_ref, be_ref, wh_ref, bh_ref,
                     w1z_ref, b1_ref, bn_ref, aux_ref):
    # TODO(synk): plan2scene's encoder is a ResNet defined outside this module;
    # it is replaced by a single linear exposing the same (weights, bottleneck)
    # interface, with fc_final kept explicit and fused here.
    bn = jnp.dot(img_ref[...].astype(jnp.bfloat16), we_ref[...],
                 preferred_element_type=jnp.float32) + be_ref[...]
    bn = jnp.maximum(bn, 0.0)
    bn_ref[...] = bn
    _head_stage(bn, seed_ref, wh_ref, bh_ref, w1z_ref, b1_ref, aux_ref)


def _head_kernel(bn_ref, seed_ref, wh_ref, bh_ref, w1z_ref, b1_ref, aux_ref):
    # Used when weights_bottleneck is provided (encoder skipped).
    _head_stage(bn_ref[...], seed_ref, wh_ref, bh_ref, w1z_ref, b1_ref, aux_ref)


# ----------------------------------------------------------------------------
# Pallas kernel 2: fused coordinate transform + noise + decoder MLP + tanh.
# Layout: channels on sublanes, pixels on lanes (lane-dense output).
# ----------------------------------------------------------------------------
def _decoder_kernel(pos_ref, aux_ref, w_ref, cb_ref, o_ref):
    pos = pos_ref[...]                         # (DIM, TP)       f32
    aux = aux_ref[...]                         # (AUX_ROWS, 1)   f32
    w = w_ref[...]                             # (3, 64, 128)    bf16 weight slab
    cb = cb_ref[...]                           # (64, 4)         f32  [b2|b3|cfx|cfy]

    px = pos[0:1, :]                           # (1, TP)
    py = pos[1:2, :]

    t00 = aux[AUX_T + 0:AUX_T + 1, :]          # (1, 1)
    t01 = aux[AUX_T + 1:AUX_T + 2, :]
    t10 = aux[AUX_T + 2:AUX_T + 3, :]
    t11 = aux[AUX_T + 3:AUX_T + 4, :]

    # TODO(synk): utils_nt.transform_coord is external; implemented as the
    # per-sample dim x dim transform coord_e = sum_d coord_d * T[d, e].
    px_t = t00 * px + t10 * py                 # (1, TP)
    py_t = t01 * px + t11 * py

    # TODO(synk): plan2scene's Noise() wraps a CUDA Perlin-noise op; stand-in is
    # a deterministic sin pseudo-noise.  Octave / 2*pi / frequency factors are
    # compile-time constants (cb cols 2/3); per-sample seed offsets (and the
    # cos->sin(+pi/2) fold) arrive pre-scaled via aux, so the whole 32-row noise
    # block is one mul/mul/add/sin chain — no concatenate, no z broadcast.
    cfx = cb[0:2 * OC, 2:3]                    # (32, 1)
    cfy = cb[0:2 * OC, 3:4]                    # (32, 1)
    s_col = aux[AUX_S:AUX_S + 2 * OC, :]       # (32, 1)
    noise = jnp.sin(cfx * px_t + cfy * py_t + s_col)          # (32, TP) f32

    # Per-pixel MLP.  z contribution pre-folded into the per-sample bias
    # aux[0:64], so K = 32 (two packed bf16 sublane tiles).  bf16 at the MXU,
    # f32 accumulation and relu/tanh (v5e-safe).
    b1c = aux[AUX_B1:AUX_B1 + MLP_HIDDEN, :]   # (64, 1)
    h = jnp.dot(w[0, :, :2 * OC], noise.astype(jnp.bfloat16),
                preferred_element_type=jnp.float32) + b1c
    h = jnp.maximum(h, 0.0)
    h = jnp.dot(w[1, :, :MLP_HIDDEN], h.astype(jnp.bfloat16),
                preferred_element_type=jnp.float32) + cb[:, 0:1]
    h = jnp.maximum(h, 0.0)
    y = jnp.dot(w[2, :, :MLP_HIDDEN], h.astype(jnp.bfloat16),
                preferred_element_type=jnp.float32) + cb[:, 1:2]
    o_ref[...] = jnp.tanh(y[:OUT_CHANNELS, :])                # (3, TP) lane-dense


def pallas_fused_decoder(pos_flat, aux_col, params, *, max_tile_pixels=4096):
    """pos_flat: (bs, DIM, H*W) f32; aux_col: (>=bs, AUX_ROWS, 1) f32 -> (bs, 3, H*W)."""
    bs, _, hw = pos_flat.shape
    hw128 = _round_up(hw, 128)
    n_tiles = _cdiv(hw128, max_tile_pixels)
    # Keep >= 2 parallel grid steps so both v7x TensorCores get work (the extra
    # step is a negligible ~0.35us on single-TC v5e/v6e).
    if bs * n_tiles < 2 and hw128 >= 256:
        n_tiles = 2
    tp = _round_up(_cdiv(hw128, n_tiles), 128)
    hwp = tp * n_tiles
    if hwp != hw:
        pos_flat = jnp.pad(pos_flat, ((0, 0), (0, 0), (0, hwp - hw)))
    out = pl.pallas_call(
        _decoder_kernel,
        out_shape=jax.ShapeDtypeStruct((bs, OUT_CHANNELS, hwp), jnp.float32),
        grid_spec=pltpu.PrefetchScalarGridSpec(
            num_scalar_prefetch=0,
            grid=(bs, n_tiles),
            in_specs=[
                pl.BlockSpec((None, DIM, tp), lambda b, t: (b, 0, t)),
                pl.BlockSpec((None, AUX_ROWS, 1), lambda b, t: (b, 0, 0)),
                pl.BlockSpec((3, MLP_HIDDEN, 128), lambda b, t: (0, 0, 0)),
                pl.BlockSpec((MLP_HIDDEN, 4), lambda b, t: (0, 0)),
            ],
            out_specs=pl.BlockSpec((None, OUT_CHANNELS, tp),
                                   lambda b, t: (b, 0, t)),
        ),
        compiler_params=pltpu.CompilerParams(
            dimension_semantics=("parallel", "parallel")),
    )(pos_flat, aux_col, params["dec_w_slab"], params["dec_cb"])
    if hwp != hw:
        out = out[:, :, :hw]
    return out


# ----------------------------------------------------------------------------
# Deterministic parameter init (synthetic weights, no checkpoint loading).
# Weights are pre-padded / pre-transposed / pre-cast (bf16 at MXU inputs) ONCE.
# ----------------------------------------------------------------------------
def init_params(key):
    ks = jax.random.split(key, 6)
    s = 0.1
    enc_in = 3 * IMAGE_RES * IMAGE_RES
    enc_w1 = s * jax.random.normal(ks[0], (enc_in, BOTTLENECK), jnp.float32)
    enc_b1 = jnp.zeros((BOTTLENECK,), jnp.float32)
    fc_final_w = s * jax.random.normal(ks[1], (BOTTLENECK, TEX_T + TEX_E), jnp.float32)
    # fc_final bias initialises the coord transform to identity (stable noise).
    fc_final_b = jnp.concatenate(
        [jnp.eye(DIM, dtype=jnp.float32).reshape(-1), jnp.zeros((TEX_E,), jnp.float32)])
    sub_w = s * jax.random.normal(ks[2], (BOTTLENECK, N_SUBSTANCES), jnp.float32)
    sub_b = jnp.zeros((N_SUBSTANCES,), jnp.float32)
    dec_w1 = s * jax.random.normal(ks[3], (CIN, MLP_HIDDEN), jnp.float32)
    dec_b1 = jnp.zeros((MLP_HIDDEN,), jnp.float32)
    dec_w2 = s * jax.random.normal(ks[4], (MLP_HIDDEN, MLP_HIDDEN), jnp.float32)
    dec_b2 = jnp.zeros((MLP_HIDDEN,), jnp.float32)
    dec_w3 = s * jax.random.normal(ks[5], (MLP_HIDDEN, OUT_CHANNELS), jnp.float32)
    dec_b3 = jnp.zeros((OUT_CHANNELS,), jnp.float32)

    # encoder stand-in + fused head, padded once, bf16 at the MXU (f32 biases)
    enc_inp = _round_up(enc_in, 128)
    enc_w1_p = _pad_to(enc_w1, enc_inp, 128).astype(jnp.bfloat16)
    enc_b1_p = _pad_to(enc_b1.reshape(1, -1), 1, 128)
    head_w = jnp.concatenate([fc_final_w, sub_w], axis=1)    # cols 0:4 T, 4:12 z, 12:16 sub
    head_b = jnp.concatenate([fc_final_b, sub_b])
    head_w_p = _pad_to(head_w, 128, 128).astype(jnp.bfloat16)
    head_b_p = _pad_to(head_b.reshape(1, -1), 1, 128)

    # decoder z-rows, folded into a per-sample bias inside the head kernel
    dec_w1z = dec_w1[:TEX_E, :].astype(jnp.bfloat16)         # (8, 64)
    dec_b1_row = dec_b1.reshape(1, -1)                       # (1, 64) f32

    # ONE packed bf16 decoder weight slab: [0]=w1(noise rows), [1]=w2, [2]=w3(padded)
    w_slab = jnp.zeros((3, MLP_HIDDEN, 128), jnp.float32)
    w_slab = w_slab.at[0, :, :2 * OC].set(dec_w1[TEX_E:, :].T)
    w_slab = w_slab.at[1, :, :MLP_HIDDEN].set(dec_w2.T)
    w_slab = w_slab.at[2, :OUT_CHANNELS, :MLP_HIDDEN].set(dec_w3.T)
    w_slab = w_slab.astype(jnp.bfloat16)

    # Small f32 constant slab: [b2 | b3(pad) | noise coef_x | noise coef_y].
    # Octave factors (2**o) and the 2*pi frequency scales are baked in here, so
    # the decoder kernel does no octave math and loads no per-sample octave rows.
    oct_vals = jnp.repeat(2.0 ** jnp.arange(OCTAVES, dtype=jnp.float32), TEX_CHANNELS)
    coefx = jnp.concatenate([TWO_PI * 0.123 * oct_vals, TWO_PI * 0.789 * oct_vals])
    coefy = jnp.concatenate([TWO_PI * 0.456 * oct_vals, TWO_PI * 0.321 * oct_vals])
    cb = jnp.zeros((MLP_HIDDEN, 4), jnp.float32)
    cb = cb.at[:, 0].set(dec_b2)
    cb = cb.at[:OUT_CHANNELS, 1].set(dec_b3)
    cb = cb.at[:2 * OC, 2].set(coefx)
    cb = cb.at[:2 * OC, 3].set(coefy)

    return dict(
        enc_w1_p=enc_w1_p, enc_b1_p=enc_b1_p,
        head_w_p=head_w_p, head_b_p=head_b_p,
        dec_w1z=dec_w1z, dec_b1_row=dec_b1_row,
        dec_w_slab=w_slab, dec_cb=cb,
    )


# ----------------------------------------------------------------------------
# TextureGen.forward
# ----------------------------------------------------------------------------
def texture_gen_forward(params, image_gt, position, seed, weights_bottleneck=None):
    bs = position.shape[0]
    h, w = position.shape[2], position.shape[3]
    bs_pad = _round_up(max(bs, 8), 8)

    seed_flat = seed.reshape(bs, OC).astype(jnp.float32)
    seed_p = _pad_to(seed_flat, bs_pad, OC)

    head_inputs = (params["head_w_p"], params["head_b_p"],
                   params["dec_w1z"], params["dec_b1_row"])
    head_specs = [
        pl.BlockSpec((128, 128), lambda i: (0, 0)),           # head_w (bf16)
        pl.BlockSpec((1, 128), lambda i: (0, 0)),              # head_b
        pl.BlockSpec((TEX_E, MLP_HIDDEN), lambda i: (0, 0)),    # dec_w1 z-rows (bf16)
        pl.BlockSpec((1, MLP_HIDDEN), lambda i: (0, 0)),        # dec_b1
    ]

    if weights_bottleneck is None:
        # --- Encoder + fc_final + substance + aux builder: ONE pallas_call ---
        x_flat = image_gt.reshape(bs, -1).astype(jnp.float32)
        enc_inp = params["enc_w1_p"].shape[0]
        x_p = _pad_to(x_flat, bs_pad, enc_inp)
        bn_full, aux_full = pl.pallas_call(
            _enc_head_kernel,
            out_shape=(jax.ShapeDtypeStruct((bs_pad, 128), jnp.float32),
                       jax.ShapeDtypeStruct((bs_pad, AUX_ROWS), jnp.float32)),
            grid_spec=pltpu.PrefetchScalarGridSpec(
                num_scalar_prefetch=0,
                grid=(1,),
                in_specs=[
                    pl.BlockSpec((bs_pad, enc_inp), lambda i: (0, 0)),
                    pl.BlockSpec((bs_pad, OC), lambda i: (0, 0)),
                    pl.BlockSpec((enc_inp, 128), lambda i: (0, 0)),   # enc_w (bf16)
                    pl.BlockSpec((1, 128), lambda i: (0, 0)),
                ] + head_specs,
                out_specs=[pl.BlockSpec((bs_pad, 128), lambda i: (0, 0)),
                           pl.BlockSpec((bs_pad, AUX_ROWS), lambda i: (0, 0))],
            ),
        )(x_p, seed_p, params["enc_w1_p"], params["enc_b1_p"], *head_inputs)
        weights_bottleneck = bn_full[:bs, :BOTTLENECK]
    else:
        # --- fc_final + substance + aux builder from given bottleneck ---
        bn_p = _pad_to(weights_bottleneck.astype(jnp.float32), bs_pad, 128)
        aux_full = pl.pallas_call(
            _head_kernel,
            out_shape=jax.ShapeDtypeStruct((bs_pad, AUX_ROWS), jnp.float32),
            grid_spec=pltpu.PrefetchScalarGridSpec(
                num_scalar_prefetch=0,
                grid=(1,),
                in_specs=[
                    pl.BlockSpec((bs_pad, 128), lambda i: (0, 0)),
                    pl.BlockSpec((bs_pad, OC), lambda i: (0, 0)),
                ] + head_specs,
                out_specs=pl.BlockSpec((bs_pad, AUX_ROWS), lambda i: (0, 0)),
            ),
        )(bn_p, seed_p, *head_inputs)

    substance_output = aux_full[:bs, AUX_SUB:AUX_SUB + N_SUBSTANCES]
    # (bs_pad, 128) -> (bs_pad, 128, 1): free bitcast; decoder reads per-sample
    # aux as a sublane column.  No other XLA ops between the two pallas_calls.
    aux_col = aux_full.reshape(bs_pad, AUX_ROWS, 1)

    # --- Fused noise + decoder MLP + tanh: ONE pallas_call, pixels on lanes ---
    pos_flat = position.reshape(bs, DIM, h * w).astype(jnp.float32)
    image_flat = pallas_fused_decoder(pos_flat, aux_col, params)      # (bs, 3, h*w)
    image_out = image_flat.reshape(bs, OUT_CHANNELS, h, w)            # NCHW, no transpose

    return image_out, weights_bottleneck, substance_output


if __name__ == "__main__":
    key = jax.random.PRNGKey(0)
    kp, ki, ksd = jax.random.split(key, 3)
    params = init_params(kp)

    bs = 2
    image_gt = jax.random.uniform(ki, (bs, 3, IMAGE_RES, IMAGE_RES), jnp.float32)
    # position field: 2-D coordinate grid in [0, 1), NCHW layout (bs, dim, h, w)
    ys, xs = jnp.meshgrid(jnp.linspace(0.0, 1.0, IMAGE_RES),
                          jnp.linspace(0.0, 1.0, IMAGE_RES), indexing="ij")
    position = jnp.broadcast_to(
        jnp.stack([xs, ys], axis=0)[None],
        (bs, DIM, IMAGE_RES, IMAGE_RES)).astype(jnp.float32)
    seed = jax.random.uniform(ksd, (bs, OCTAVES, TEX_CHANNELS), jnp.float32)

    fwd = jax.jit(texture_gen_forward)
    image_out, bottleneck, substance = fwd(params, image_gt, position, seed)
    jax.block_until_ready((image_out, bottleneck, substance))

    assert image_out.shape == (bs, OUT_CHANNELS, IMAGE_RES, IMAGE_RES)
    assert image_out.dtype == jnp.float32
    assert bottleneck.shape == (bs, BOTTLENECK)
    assert substance.shape == (bs, N_SUBSTANCES)
    assert bool(jnp.all(jnp.abs(image_out) <= 1.0))   # tanh range
    assert bool(jnp.all(jnp.isfinite(image_out)))
    assert bool(jnp.all(jnp.isfinite(substance)))

    # Exercise the weights_bottleneck-given path (encoder skipped), as in torch.
    image_out2, bottleneck2, substance2 = jax.jit(texture_gen_forward)(
        params, None, position, seed, bottleneck)
    jax.block_until_ready((image_out2, bottleneck2, substance2))
    assert image_out2.shape == (bs, OUT_CHANNELS, IMAGE_RES, IMAGE_RES)
    assert substance2.shape == (bs, N_SUBSTANCES)
    assert bool(jnp.all(jnp.isfinite(image_out2)))

    print("KERNEL_OK")
</pallas_src>

<mosaic_0001>
module attributes {stable_mosaic.version = 11 : i64} {
  func.func @_enc_head_kernel(%arg0: i32, %arg1: memref<8x768xf32, #tpu.memory_space<vmem>>, %arg2: memref<8x16xf32, #tpu.memory_space<vmem>>, %arg3: memref<768x128xbf16, #tpu.memory_space<vmem>>, %arg4: memref<1x128xf32, #tpu.memory_space<vmem>>, %arg5: memref<128x128xbf16, #tpu.memory_space<vmem>>, %arg6: memref<1x128xf32, #tpu.memory_space<vmem>>, %arg7: memref<8x64xbf16, #tpu.memory_space<vmem>>, %arg8: memref<1x64xf32, #tpu.memory_space<vmem>>, %arg9: memref<8x128xf32, #tpu.memory_space<vmem>>, %arg10: memref<8x128xf32, #tpu.memory_space<vmem>>) attributes {dimension_semantics = [#tpu.dimension_semantics<arbitrary>], iteration_bounds = array<i64: 1>, scalar_prefetch = 0 : i64, scratch_operands = 0 : i64, tpu.core_type = #tpu.core_type<tc>, window_params = [{pipeline_mode = #tpu.pipeline_mode<synchronous>, transform_indices = @transform_0, window_bounds = array<i64: 8, 768>}, {pipeline_mode = #tpu.pipeline_mode<synchronous>, transform_indices = @transform_1, window_bounds = array<i64: 8, 16>}, {pipeline_mode = #tpu.pipeline_mode<synchronous>, transform_indices = @transform_2, window_bounds = array<i64: 768, 128>}, {pipeline_mode = #tpu.pipeline_mode<synchronous>, transform_indices = @transform_3, window_bounds = array<i64: 1, 128>}, {pipeline_mode = #tpu.pipeline_mode<synchronous>, transform_indices = @transform_4, window_bounds = array<i64: 128, 128>}, {pipeline_mode = #tpu.pipeline_mode<synchronous>, transform_indices = @transform_5, window_bounds = array<i64: 1, 128>}, {pipeline_mode = #tpu.pipeline_mode<synchronous>, transform_indices = @transform_6, window_bounds = array<i64: 8, 64>}, {pipeline_mode = #tpu.pipeline_mode<synchronous>, transform_indices = @transform_7, window_bounds = array<i64: 1, 64>}, {pipeline_mode = #tpu.pipeline_mode<synchronous>, transform_indices = @transform_8, window_bounds = array<i64: 8, 128>}, {pipeline_mode = #tpu.pipeline_mode<synchronous>, transform_indices = @transform_9, window_bounds = array<i64: 8, 128>}]} {
    %c0 = arith.constant 0 : index
    %c0_0 = arith.constant 0 : index
    %0 = vector.load %arg1[%c0, %c0_0] : memref<8x768xf32, #tpu.memory_space<vmem>>, vector<8x768xf32>
    %1 = arith.truncf %0 : vector<8x768xf32> to vector<8x768xbf16>
    %c0_1 = arith.constant 0 : index
    %c0_2 = arith.constant 0 : index
    %2 = vector.load %arg3[%c0_1, %c0_2] : memref<768x128xbf16, #tpu.memory_space<vmem>>, vector<768x128xbf16>
    %cst = arith.constant dense<0.000000e+00> : vector<8x128xf32>
    %3 = tpu.matmul %1, %2, %cst {dimension_numbers = #tpu.dot_dimension_numbers<[1], [0], [0], [1], [0, 0, 1, 1], [], []>} : vector<8x768xbf16>, vector<768x128xbf16>, vector<8x128xf32> -> vector<8x128xf32>
    %c0_3 = arith.constant 0 : index
    %c0_4 = arith.constant 0 : index
    %4 = vector.load %arg4[%c0_3, %c0_4] : memref<1x128xf32, #tpu.memory_space<vmem>>, vector<1x128xf32>
    %5 = vector.broadcast %4 : vector<1x128xf32> to vector<8x128xf32>
    %6 = arith.addf %3, %5 : vector<8x128xf32>
    %cst_5 = arith.constant 0.000000e+00 : f32
    %7 = vector.broadcast %cst_5 : f32 to vector<8x128xf32>
    %8 = arith.maximumf %6, %7 : vector<8x128xf32>
    %c0_6 = arith.constant 0 : index
    %c0_7 = arith.constant 0 : index
    %9 = vector.load %arg9[%c0_6, %c0_7] : memref<8x128xf32, #tpu.memory_space<vmem>>, vector<8x128xf32>
    tpu.vector_store %arg9[%c0_6, %c0_7], %8 {strides = array<i32>} : memref<8x128xf32, #tpu.memory_space<vmem>>, vector<8x128xf32>,
    %10 = arith.truncf %8 : vector<8x128xf32> to vector<8x128xbf16>
    %c0_8 = arith.constant 0 : index
    %c0_9 = arith.constant 0 : index
    %11 = vector.load %arg5[%c0_8, %c0_9] : memref<128x128xbf16, #tpu.memory_space<vmem>>, vector<128x128xbf16>
    %cst_10 = arith.constant dense<0.000000e+00> : vector<8x128xf32>
    %12 = tpu.matmul %10, %11, %cst_10 {dimension_numbers = #tpu.dot_dimension_numbers<[1], [0], [0], [1], [0, 0, 1, 1], [], []>} : vector<8x128xbf16>, vector<128x128xbf16>, vector<8x128xf32> -> vector<8x128xf32>
    %c0_11 = arith.constant 0 : index
    %c0_12 = arith.constant 0 : index
    %13 = vector.load %arg6[%c0_11, %c0_12] : memref<1x128xf32, #tpu.memory_space<vmem>>, vector<1x128xf32>
    %14 = vector.broadcast %13 : vector<1x128xf32> to vector<8x128xf32>
    %15 = arith.addf %12, %14 : vector<8x128xf32>
    %16 = vector.extract_strided_slice %15 {offsets = [0, 4], sizes = [8, 8], strides = [1, 1]} : vector<8x128xf32> to vector<8x8xf32>
    %17 = arith.truncf %16 : vector<8x8xf32> to vector<8x8xbf16>
    %c0_13 = arith.constant 0 : index
    %c0_14 = arith.constant 0 : index
    %18 = vector.load %arg7[%c0_13, %c0_14] : memref<8x64xbf16, #tpu.memory_space<vmem>>, vector<8x64xbf16>
    %cst_15 = arith.constant dense<0.000000e+00> : vector<8x64xf32>
    %19 = tpu.matmul %17, %18, %cst_15 {dimension_numbers = #tpu.dot_dimension_numbers<[1], [0], [0], [1], [0, 0, 1, 1], [], []>} : vector<8x8xbf16>, vector<8x64xbf16>, vector<8x64xf32> -> vector<8x64xf32>
    %c0_16 = arith.constant 0 : index
    %c0_17 = arith.constant 0 : index
    %20 = vector.load %arg8[%c0_16, %c0_17] : memref<1x64xf32, #tpu.memory_space<vmem>>, vector<1x64xf32>
    %21 = vector.broadcast %20 : vector<1x64xf32> to vector<8x64xf32>
    %22 = arith.addf %19, %21 : vector<8x64xf32>
    %c0_18 = arith.constant 0 : index
    %c0_19 = arith.constant 0 : index
    %23 = vector.load %arg2[%c0_18, %c0_19] : memref<8x16xf32, #tpu.memory_space<vmem>>, vector<8x16xf32>
    %cst_20 = arith.constant 0.000000e+00 : f32
    %24 = vector.broadcast %cst_20 : f32 to vector<8x128xf32>
    %c0_21 = arith.constant 0 : index
    %c0_22 = arith.constant 0 : index
    %25 = vector.load %arg10[%c0_21, %c0_22] : memref<8x128xf32, #tpu.memory_space<vmem>>, vector<8x128xf32>
    tpu.vector_store %arg10[%c0_21, %c0_22], %24 {strides = array<i32>} : memref<8x128xf32, #tpu.memory_space<vmem>>, vector<8x128xf32>,
    %c0_23 = arith.constant 0 : index
    %c0_24 = arith.constant 0 : index
    %26 = vector.load %arg10[%c0_23, %c0_24] : memref<8x128xf32, #tpu.memory_space<vmem>>, vector<8x64xf32>
    tpu.vector_store %arg10[%c0_23, %c0_24], %22 {strides = array<i32>} : memref<8x128xf32, #tpu.memory_space<vmem>>, vector<8x64xf32>,
    %cst_25 = arith.constant 1.700000e+00 : f32
    %27 = vector.broadcast %cst_25 : f32 to vector<8x16xf32>
    %28 = arith.mulf %27, %23 : vector<8x16xf32>
    %c0_26 = arith.constant 0 : index
    %c64 = arith.constant 64 : index
    %29 = vector.load %arg10[%c0_26, %c64] : memref<8x128xf32, #tpu.memory_space<vmem>>, vector<8x16xf32>
    tpu.vector_store %arg10[%c0_26, %c64], %28 {strides = array<i32>} : memref<8x128xf32, #tpu.memory_space<vmem>>, vector<8x16xf32>,
    %cst_27 = arith.constant 2.300000e+00 : f32
    %30 = vector.broadcast %cst_27 : f32 to vector<8x16xf32>
    %31 = arith.mulf %30, %23 : vector<8x16xf32>
    %cst_28 = arith.constant 1.57079637 : f32
    %32 = vector.broadcast %cst_28 : f32 to vector<8x16xf32>
    %33 = arith.addf %31, %32 : vector<8x16xf32>
    %c0_29 = arith.constant 0 : index
    %c80 = arith.constant 80 : index
    %34 = vector.load %arg10[%c0_29, %c80] : memref<8x128xf32, #tpu.memory_space<vmem>>, vector<8x16xf32>
    tpu.vector_store %arg10[%c0_29, %c80], %33 {strides = array<i32>} : memref<8x128xf32, #tpu.memory_space<vmem>>, vector<8x16xf32>,
    %35 = vector.extract_strided_slice %15 {offsets = [0, 0], sizes = [8, 4], strides = [1, 1]} : vector<8x128xf32> to vector<8x4xf32>
    %c0_30 = arith.constant 0 : index
    %c96 = arith.constant 96 : index
    %36 = vector.load %arg10[%c0_30, %c96] : memref<8x128xf32, #tpu.memory_space<vmem>>, vector<8x4xf32>
    tpu.vector_store %arg10[%c0_30, %c96], %35 {strides = array<i32>} : memref<8x128xf32, #tpu.memory_space<vmem>>, vector<8x4xf32>,
    %37 = vector.extract_strided_slice %15 {offsets = [0, 12], sizes = [8, 4], strides = [1, 1]} : vector<8x128xf32> to vector<8x4xf32>
    %c0_31 = arith.constant 0 : index
    %c100 = arith.constant 100 : index
    %38 = vector.load %arg10[%c0_31, %c100] : memref<8x128xf32, #tpu.memory_space<vmem>>, vector<8x4xf32>
    tpu.vector_store %arg10[%c0_31, %c100], %37 {strides = array<i32>} : memref<8x128xf32, #tpu.memory_space<vmem>>, vector<8x4xf32>,
    return
  }
  func.func @transform_0(%arg0: i32) -> (i32, i32) {
    %c0_i32 = arith.constant 0 : i32
    %c0_i32_0 = arith.constant 0 : i32
    %c0_i32_1 = arith.constant 0 : i32
    return %c0_i32, %c0_i32_0 : i32, i32
  }
  func.func @transform_1(%arg0: i32) -> (i32, i32) {
    %c0_i32 = arith.constant 0 : i32
    %c0_i32_0 = arith.constant 0 : i32
    %c0_i32_1 = arith.constant 0 : i32
    return %c0_i32, %c0_i32_0 : i32, i32
  }
  func.func @transform_2(%arg0: i32) -> (i32, i32) {
    %c0_i32 = arith.constant 0 : i32
    %c0_i32_0 = arith.constant 0 : i32
    %c0_i32_1 = arith.constant 0 : i32
    return %c0_i32, %c0_i32_0 : i32, i32
  }
  func.func @transform_3(%arg0: i32) -> (i32, i32) {
    %c0_i32 = arith.constant 0 : i32
    %c0_i32_0 = arith.constant 0 : i32
    %c0_i32_1 = arith.constant 0 : i32
    return %c0_i32, %c0_i32_0 : i32, i32
  }
  func.func @transform_4(%arg0: i32) -> (i32, i32) {
    %c0_i32 = arith.constant 0 : i32
    %c0_i32_0 = arith.constant 0 : i32
    %c0_i32_1 = arith.constant 0 : i32
    return %c0_i32, %c0_i32_0 : i32, i32
  }
  func.func @transform_5(%arg0: i32) -> (i32, i32) {
    %c0_i32 = arith.constant 0 : i32
    %c0_i32_0 = arith.constant 0 : i32
    %c0_i32_1 = arith.constant 0 : i32
    return %c0_i32, %c0_i32_0 : i32, i32
  }
  func.func @transform_6(%arg0: i32) -> (i32, i32) {
    %c0_i32 = arith.constant 0 : i32
    %c0_i32_0 = arith.constant 0 : i32
    %c0_i32_1 = arith.constant 0 : i32
    return %c0_i32, %c0_i32_0 : i32, i32
  }
  func.func @transform_7(%arg0: i32) -> (i32, i32) {
    %c0_i32 = arith.constant 0 : i32
    %c0_i32_0 = arith.constant 0 : i32
    %c0_i32_1 = arith.constant 0 : i32
    return %c0_i32, %c0_i32_0 : i32, i32
  }
  func.func @transform_8(%arg0: i32) -> (i32, i32) {
    %c0_i32 = arith.constant 0 : i32
    %c0_i32_0 = arith.constant 0 : i32
    %c0_i32_1 = arith.constant 0 : i32
    return %c0_i32, %c0_i32_0 : i32, i32
  }
  func.func @transform_9(%arg0: i32) -> (i32, i32) {
    %c0_i32 = arith.constant 0 : i32
    %c0_i32_0 = arith.constant 0 : i32
    %c0_i32_1 = arith.constant 0 : i32
    return %c0_i32, %c0_i32_0 : i32, i32
  }
}

module attributes {stable_mosaic.version = 11 : i64} {
  func.func @_decoder_kernel(%arg0: i32, %arg1: i32, %arg2: memref<1x2x256xf32, #tpu.memory_space<vmem>>, %arg3: memref<1x128x1xf32, #tpu.memory_space<vmem>>, %arg4: memref<3x64x128xbf16, #tpu.memory_space<vmem>>, %arg5: memref<64x4xf32, #tpu.memory_space<vmem>>, %arg6: memref<1x3x256xf32, #tpu.memory_space<vmem>>) attributes {dimension_semantics = [#tpu.dimension_semantics<parallel>, #tpu.dimension_semantics<parallel>], iteration_bounds = array<i64: 2, 1>, scalar_prefetch = 0 : i64, scratch_operands = 0 : i64, tpu.core_type = #tpu.core_type<tc>, window_params = [{transform_indices = @transform_0, window_bounds = array<i64: 1, 2, 256>}, {transform_indices = @transform_1, window_bounds = array<i64: 1, 128, 1>}, {pipeline_mode = #tpu.pipeline_mode<synchronous>, transform_indices = @transform_2, window_bounds = array<i64: 3, 64, 128>}, {pipeline_mode = #tpu.pipeline_mode<synchronous>, transform_indices = @transform_3, window_bounds = array<i64: 64, 4>}, {transform_indices = @transform_4, window_bounds = array<i64: 1, 3, 256>}]} {
    %c0 = arith.constant 0 : index
    %c0_0 = arith.constant 0 : index
    %c0_1 = arith.constant 0 : index
    %0 = vector.load %arg2[%c0, %c0_0, %c0_1] : memref<1x2x256xf32, #tpu.memory_space<vmem>>, vector<1x2x256xf32>
    %1 = vector.shape_cast %0 : vector<1x2x256xf32> to vector<2x256xf32>
    %c0_2 = arith.constant 0 : index
    %c0_3 = arith.constant 0 : index
    %c0_4 = arith.constant 0 : index
    %2 = vector.load %arg3[%c0_2, %c0_3, %c0_4] : memref<1x128x1xf32, #tpu.memory_space<vmem>>, vector<1x128x1xf32>
    %3 = vector.shape_cast %2 : vector<1x128x1xf32> to vector<128x1xf32>
    %c0_5 = arith.constant 0 : index
    %c0_6 = arith.constant 0 : index
    %c0_7 = arith.constant 0 : index
    %4 = vector.load %arg4[%c0_5, %c0_6, %c0_7] : memref<3x64x128xbf16, #tpu.memory_space<vmem>>, vector<3x64x128xbf16>
    %c0_8 = arith.constant 0 : index
    %c0_9 = arith.constant 0 : index
    %5 = vector.load %arg5[%c0_8, %c0_9] : memref<64x4xf32, #tpu.memory_space<vmem>>, vector<64x4xf32>
    %6 = vector.extract_strided_slice %1 {offsets = [0, 0], sizes = [1, 256], strides = [1, 1]} : vector<2x256xf32> to vector<1x256xf32>
    %7 = vector.extract_strided_slice %1 {offsets = [1, 0], sizes = [1, 256], strides = [1, 1]} : vector<2x256xf32> to vector<1x256xf32>
    %8 = vector.extract_strided_slice %3 {offsets = [96, 0], sizes = [1, 1], strides = [1, 1]} : vector<128x1xf32> to vector<1x1xf32>
    %9 = vector.extract_strided_slice %3 {offsets = [97, 0], sizes = [1, 1], strides = [1, 1]} : vector<128x1xf32> to vector<1x1xf32>
    %10 = vector.extract_strided_slice %3 {offsets = [98, 0], sizes = [1, 1], strides = [1, 1]} : vector<128x1xf32> to vector<1x1xf32>
    %11 = vector.extract_strided_slice %3 {offsets = [99, 0], sizes = [1, 1], strides = [1, 1]} : vector<128x1xf32> to vector<1x1xf32>
    %12 = vector.broadcast %8 : vector<1x1xf32> to vector<1x256xf32>
    %13 = arith.mulf %12, %6 : vector<1x256xf32>
    %14 = vector.broadcast %10 : vector<1x1xf32> to vector<1x256xf32>
    %15 = arith.mulf %14, %7 : vector<1x256xf32>
    %16 = arith.addf %13, %15 : vector<1x256xf32>
    %17 = vector.broadcast %9 : vector<1x1xf32> to vector<1x256xf32>
    %18 = arith.mulf %17, %6 : vector<1x256xf32>
    %19 = vector.broadcast %11 : vector<1x1xf32> to vector<1x256xf32>
    %20 = arith.mulf %19, %7 : vector<1x256xf32>
    %21 = arith.addf %18, %20 : vector<1x256xf32>
    %22 = vector.extract_strided_slice %5 {offsets = [0, 2], sizes = [32, 1], strides = [1, 1]} : vector<64x4xf32> to vector<32x1xf32>
    %23 = vector.extract_strided_slice %5 {offsets = [0, 3], sizes = [32, 1], strides = [1, 1]} : vector<64x4xf32> to vector<32x1xf32>
    %24 = vector.extract_strided_slice %3 {offsets = [64, 0], sizes = [32, 1], strides = [1, 1]} : vector<128x1xf32> to vector<32x1xf32>
    %25 = vector.broadcast %22 : vector<32x1xf32> to vector<32x256xf32>
    %26 = vector.broadcast %16 : vector<1x256xf32> to vector<32x256xf32>
    %27 = arith.mulf %25, %26 : vector<32x256xf32>
    %28 = vector.broadcast %23 : vector<32x1xf32> to vector<32x256xf32>
    %29 = vector.broadcast %21 : vector<1x256xf32> to vector<32x256xf32>
    %30 = arith.mulf %28, %29 : vector<32x256xf32>
    %31 = arith.addf %27, %30 : vector<32x256xf32>
    %32 = vector.broadcast %24 : vector<32x1xf32> to vector<32x256xf32>
    %33 = arith.addf %31, %32 : vector<32x256xf32>
    %34 = math.sin %33 : vector<32x256xf32>
    %35 = vector.extract_strided_slice %3 {offsets = [0, 0], sizes = [64, 1], strides = [1, 1]} : vector<128x1xf32> to vector<64x1xf32>
    %36 = vector.extract_strided_slice %4 {offsets = [0, 0, 0], sizes = [1, 64, 32], strides = [1, 1, 1]} : vector<3x64x128xbf16> to vector<1x64x32xbf16>
    %37 = vector.shape_cast %36 : vector<1x64x32xbf16> to vector<64x32xbf16>
    %38 = arith.truncf %34 : vector<32x256xf32> to vector<32x256xbf16>
    %cst = arith.constant dense<0.000000e+00> : vector<64x256xf32>
    %39 = tpu.matmul %37, %38, %cst {dimension_numbers = #tpu.dot_dimension_numbers<[1], [0], [0], [1], [0, 0, 1, 1], [], []>} : vector<64x32xbf16>, vector<32x256xbf16>, vector<64x256xf32> -> vector<64x256xf32>
    %40 = vector.broadcast %35 : vector<64x1xf32> to vector<64x256xf32>
    %41 = arith.addf %39, %40 : vector<64x256xf32>
    %cst_10 = arith.constant 0.000000e+00 : f32
    %42 = vector.broadcast %cst_10 : f32 to vector<64x256xf32>
    %43 = arith.maximumf %41, %42 : vector<64x256xf32>
    %44 = vector.extract_strided_slice %4 {offsets = [1, 0, 0], sizes = [1, 64, 64], strides = [1, 1, 1]} : vector<3x64x128xbf16> to vector<1x64x64xbf16>
    %45 = vector.shape_cast %44 : vector<1x64x64xbf16> to vector<64x64xbf16>
    %46 = arith.truncf %43 : vector<64x256xf32> to vector<64x256xbf16>
    %cst_11 = arith.constant dense<0.000000e+00> : vector<64x256xf32>
    %47 = tpu.matmul %45, %46, %cst_11 {dimension_numbers = #tpu.dot_dimension_numbers<[1], [0], [0], [1], [0, 0, 1, 1], [], []>} : vector<64x64xbf16>, vector<64x256xbf16>, vector<64x256xf32> -> vector<64x256xf32>
    %48 = vector.extract_strided_slice %5 {offsets = [0, 0], sizes = [64, 1], strides = [1, 1]} : vector<64x4xf32> to vector<64x1xf32>
    %49 = vector.broadcast %48 : vector<64x1xf32> to vector<64x256xf32>
    %50 = arith.addf %47, %49 : vector<64x256xf32>
    %cst_12 = arith.constant 0.000000e+00 : f32
    %51 = vector.broadcast %cst_12 : f32 to vector<64x256xf32>
    %52 = arith.maximumf %50, %51 : vector<64x256xf32>
    %53 = vector.extract_strided_slice %4 {offsets = [2, 0, 0], sizes = [1, 64, 64], strides = [1, 1, 1]} : vector<3x64x128xbf16> to vector<1x64x64xbf16>
    %54 = vector.shape_cast %53 : vector<1x64x64xbf16> to vector<64x64xbf16>
    %55 = arith.truncf %52 : vector<64x256xf32> to vector<64x256xbf16>
    %cst_13 = arith.constant dense<0.000000e+00> : vector<64x256xf32>
    %56 = tpu.matmul %54, %55, %cst_13 {dimension_numbers = #tpu.dot_dimension_numbers<[1], [0], [0], [1], [0, 0, 1, 1], [], []>} : vector<64x64xbf16>, vector<64x256xbf16>, vector<64x256xf32> -> vector<64x256xf32>
    %57 = vector.extract_strided_slice %5 {offsets = [0, 1], sizes = [64, 1], strides = [1, 1]} : vector<64x4xf32> to vector<64x1xf32>
    %58 = vector.broadcast %57 : vector<64x1xf32> to vector<64x256xf32>
    %59 = arith.addf %56, %58 : vector<64x256xf32>
    %60 = vector.extract_strided_slice %59 {offsets = [0, 0], sizes = [3, 256], strides = [1, 1]} : vector<64x256xf32> to vector<3x256xf32>
    %61 = math.tanh %60 : vector<3x256xf32>
    %c0_14 = arith.constant 0 : index
    %c0_15 = arith.constant 0 : index
    %c0_16 = arith.constant 0 : index
    %62 = vector.load %arg6[%c0_14, %c0_15, %c0_16] : memref<1x3x256xf32, #tpu.memory_space<vmem>>, vector<1x3x256xf32>
    %63 = vector.shape_cast %62 : vector<1x3x256xf32> to vector<3x256xf32>
    %64 = vector.shape_cast %61 : vector<3x256xf32> to vector<1x3x256xf32>
    tpu.vector_store %arg6[%c0_14, %c0_15, %c0_16], %64 {strides = array<i32>} : memref<1x3x256xf32, #tpu.memory_space<vmem>>, vector<1x3x256xf32>,
    return
  }
  func.func @transform_0(%arg0: i32, %arg1: i32) -> (i32, i32, i32) {
    %c0_i32 = arith.constant 0 : i32
    %c0_i32_0 = arith.constant 0 : i32
    return %arg0, %c0_i32, %arg1 : i32, i32, i32
  }
  func.func @transform_1(%arg0: i32, %arg1: i32) -> (i32, i32, i32) {
    %c0_i32 = arith.constant 0 : i32
    %c0_i32_0 = arith.constant 0 : i32
    %c0_i32_1 = arith.constant 0 : i32
    return %arg0, %c0_i32, %c0_i32_0 : i32, i32, i32
  }
  func.func @transform_2(%arg0: i32, %arg1: i32) -> (i32, i32, i32) {
    %c0_i32 = arith.constant 0 : i32
    %c0_i32_0 = arith.constant 0 : i32
    %c0_i32_1 = arith.constant 0 : i32
    %c0_i32_2 = arith.constant 0 : i32
    return %c0_i32, %c0_i32_0, %c0_i32_1 : i32, i32, i32
  }
  func.func @transform_3(%arg0: i32, %arg1: i32) -> (i32, i32) {
    %c0_i32 = arith.constant 0 : i32
    %c0_i32_0 = arith.constant 0 : i32
    %c0_i32_1 = arith.constant 0 : i32
    return %c0_i32, %c0_i32_0 : i32, i32
  }
  func.func @transform_4(%arg0: i32, %arg1: i32) -> (i32, i32, i32) {
    %c0_i32 = arith.constant 0 : i32
    %c0_i32_0 = arith.constant 0 : i32
    return %arg0, %c0_i32, %arg1 : i32, i32, i32
  }
}

</mosaic_0001>

<llo_original>
// kernel: texture_gen_forward.3
$region0: #{texture_gen_forward.3}
  #allocation0 [shape = 'u32[]', space=smem, size = 0x4, offset = 0x4, fixed_abs, tag = 'smem constant byte address 0x4 - core index']
  #allocation1 [shape = 'u32[144,128]{1,0:T(1,128)}', space=vmem, size = 0x12000, scoped, tag = 'internal scratch']
  %s0 = inlined_call_operand.vmem [shape: f32[2,2,256], index: 0, kind: input, shape index: {}]
  %s1 = inlined_call_operand.vmem [shape: f32[8,128,1], index: 1, kind: input, shape index: {}]
  %s2 = inlined_call_operand.vmem [shape: bf16[3,64,128], index: 2, kind: input, shape index: {}]
  %s3 = inlined_call_operand.vmem [shape: f32[64,4], index: 3, kind: input, shape index: {}]
  %s4 = inlined_call_operand.vmem [shape: f32[2,3,256], index: 4, kind: output, shape index: {}]
  %s5 = sld [smem:[#allocation0]]
  $region49: #{texture_gen_forward.3} parent=0
    _
  %s7 = ssub.s32 1, %s5
  %s8 = scalar_select 0, %s7, %s5
  loop: start=0, step=1, limit=4
  $region2: #{texture_gen_forward.3} parent=0 // loop_pre_header
    _
  $region3: #{texture_gen_forward.3} parent=0 // loop_header
    %s10 = sphi 0, %s14
    %p11 = scmp.ge.s32.totalorder %s10, 4
    %s17 = sphi 0, %s29
    %s18 = sphi 0, %s25
    %s19 = sphi 0, %s17
    %s20 = sphi 0, %s18
    %s21 = sphi 0, %s19
    %s22 = sphi 0, %s20
    %s34 = sphi 0, %s36
    %s37 = sphi 0, %s34
    %s38 = sphi 0, %s37
    %s54 = sphi 0, %s38
    %s60 = sphi 0, %s62
    %s63 = sphi 0, %s60
    %s64 = sphi 0, %s63
    %s80 = sphi 0, %s64
    %s84 = sphi 0, %s84
    %s86 = sphi 0, %s84
    %s87 = sphi 0, %s86
    %s101 = sphi 0, %s87
    %s105 = sphi 0, %s105
    %s107 = sphi 0, %s105
    %s108 = sphi 0, %s107
    %s122 = sphi 0, %s108
    %s130 = sphi 0, %s132
    %s133 = sphi 0, %s130
    %s134 = sphi 0, %s133
    %s150 = sphi 0, %s134
  $region4: #{texture_gen_forward.3} parent=0 // loop_header_branch
    %13 = sbr.rel (%p11) target = $region8
  $region5: #{texture_gen_forward.3} parent=0 // loop_body
    %s15 = ssub.s32 %s10, 1
    %s16 = ssub.s32 %s10, 2
    %s23 = sadd.s32 1, %s18
    %p24 = scmp.ge.s32.totalorder %s23, 1
    %s25 = scalar_select %p24, 0, %s23
    %s26 = sadd.s32 1, %s17
    %s27 = scalar_select %p24, %s26, %s17
    %p28 = scmp.ge.s32.totalorder %s27, 2
    %s29 = scalar_select %p28, 0, %s27
    %s30 = ssub.s32 %s17, %s29
    %s31 = ssub.s32 %s18, %s25
    %s32 = sor.u32 %s30, %s31
    %p33 = scmp.eq.s32.totalorder %s32, 0
    %s35 = sadd.s32 %s34, 1
    %s36 = scalar_select %p33, %s34, %s35
    %p39 = pneg %p33
    %p40 = scmp.eq.s32.totalorder %s10, 1
    %p41 = por %p39, %p40
    %p42 = scmp.ne.s32.totalorder %s34, %s37
    %p43 = scmp.eq.s32.totalorder %s10, 0
    %p44 = por %p42, %p43
    %p45 = scmp.ne.s32.totalorder %s34, %s37
    %p46 = scmp.eq.s32.totalorder %s15, 1
    %p47 = por %p45, %p46
    %p48 = scmp.ne.s32.totalorder %s37, %s38
    %p49 = scmp.eq.s32.totalorder %s15, 0
    %p50 = por %p48, %p49
    %p51 = scmp.ne.s32.totalorder %s37, %s38
    %p52 = scmp.eq.s32.totalorder %s16, 1
    %p53 = por %p51, %p52
    %p55 = scmp.ne.s32.totalorder %s38, %s54
    %p56 = scmp.eq.s32.totalorder %s16, 0
    %p57 = por %p55, %p56
    %s58 = ssub.s32 %s17, %s29
    %p59 = scmp.eq.s32.totalorder %s58, 0
    %s61 = sadd.s32 %s60, 1
    %s62 = scalar_select %p59, %s60, %s61
    %p65 = pneg %p59
    %p66 = scmp.eq.s32.totalorder %s10, 1
    %p67 = por %p65, %p66
    %p68 = scmp.ne.s32.totalorder %s60, %s63
    %p69 = scmp.eq.s32.totalorder %s10, 0
    %p70 = por %p68, %p69
    %p71 = scmp.ne.s32.totalorder %s60, %s63
    %p72 = scmp.eq.s32.totalorder %s15, 1
    %p73 = por %p71, %p72
    %p74 = scmp.ne.s32.totalorder %s63, %s64
    %p75 = scmp.eq.s32.totalorder %s15, 0
    %p76 = por %p74, %p75
    %p77 = scmp.ne.s32.totalorder %s63, %s64
    %p78 = scmp.eq.s32.totalorder %s16, 1
    %p79 = por %p77, %p78
    %p81 = scmp.ne.s32.totalorder %s64, %s80
    %p82 = scmp.eq.s32.totalorder %s16, 0
    %p83 = por %p81, %p82
    %s85 = sadd.s32 %s84, 1
    %p88 = scmp.eq.s32.totalorder %s10, 1
    %p89 = scmp.ne.s32.totalorder %s84, %s86
    %p90 = scmp.eq.s32.totalorder %s10, 0
    %p91 = por %p89, %p90
    %p92 = scmp.ne.s32.totalorder %s84, %s86
    %p93 = scmp.eq.s32.totalorder %s15, 1
    %p94 = por %p92, %p93
    %p95 = scmp.ne.s32.totalorder %s86, %s87
    %p96 = scmp.eq.s32.totalorder %s15, 0
    %p97 = por %p95, %p96
    %p98 = scmp.ne.s32.totalorder %s86, %s87
    %p99 = scmp.eq.s32.totalorder %s16, 1
    %p100 = por %p98, %p99
    %p102 = scmp.ne.s32.totalorder %s87, %s101
    %p103 = scmp.eq.s32.totalorder %s16, 0
    %p104 = por %p102, %p103
    %s106 = sadd.s32 %s105, 1
    %p109 = scmp.eq.s32.totalorder %s10, 1
    %p110 = scmp.ne.s32.totalorder %s105, %s107
    %p111 = scmp.eq.s32.totalorder %s10, 0
    %p112 = por %p110, %p111
    %p113 = scmp.ne.s32.totalorder %s105, %s107
    %p114 = scmp.eq.s32.totalorder %s15, 1
    %p115 = por %p113, %p114
    %p116 = scmp.ne.s32.totalorder %s107, %s108
    %p117 = scmp.eq.s32.totalorder %s15, 0
    %p118 = por %p116, %p117
    %p119 = scmp.ne.s32.totalorder %s107, %s108
    %p120 = scmp.eq.s32.totalorder %s16, 1
    %p121 = por %p119, %p120
    %p123 = scmp.ne.s32.totalorder %s108, %s122
    %p124 = scmp.eq.s32.totalorder %s16, 0
    %p125 = por %p123, %p124
    %s126 = ssub.s32 %s17, %s29
    %s127 = ssub.s32 %s18, %s25
    %s128 = sor.u32 %s126, %s127
    %p129 = scmp.eq.s32.totalorder %s128, 0
    %s131 = sadd.s32 %s130, 1
    %s132 = scalar_select %p129, %s130, %s131
    %p135 = pneg %p129
    %p136 = scmp.eq.s32.totalorder %s10, 1
    %p137 = por %p135, %p136
    %p138 = scmp.ne.s32.totalorder %s130, %s133
    %p139 = scmp.eq.s32.totalorder %s10, 0
    %p140 = por %p138, %p139
    %p141 = scmp.ne.s32.totalorder %s130, %s133
    %p142 = scmp.eq.s32.totalorder %s15, 1
    %p143 = por %p141, %p142
    %p144 = scmp.ne.s32.totalorder %s133, %s134
    %p145 = scmp.eq.s32.totalorder %s15, 0
    %p146 = por %p144, %p145
    %p147 = scmp.ne.s32.totalorder %s133, %s134
    %p148 = scmp.eq.s32.totalorder %s16, 1
    %p149 = por %p147, %p148
    %p151 = scmp.ne.s32.totalorder %s134, %s150
    %p152 = scmp.eq.s32.totalorder %s16, 0
    %p153 = por %p151, %p152
    %p154 = scmp.le.s32.totalorder 1, %s10
    %p155 = scmp.lt.s32.totalorder %s10, 3
    %p156 = pnand %p154, %p155
    %p157 = pneg %p156
    // Predicated region
    $region9: #{texture_gen_forward.3} parent=5 // pred_check
      _
    $region10: #{texture_gen_forward.3} parent=5 // pred_check_branch
      %159 = sbr.rel (%p156) target = $region12
    $region11: #{texture_gen_forward.3} parent=5 // pred_region
      %s160 = ssub.s32 %s10, 1
      // Predicated region
      $region13: #{texture_gen_forward.3} parent=11 // pred_check
        %p161 = pneg %p97
      $region14: #{texture_gen_forward.3} parent=11 // pred_check_branch
        %163 = sbr.rel (%p161) target = $region16
      $region15: #{texture_gen_forward.3} parent=11 // pred_region
        _
      $region16: #{texture_gen_forward.3} parent=11 // pred_fallthru
        _
      // Predicated region
      $region17: #{texture_gen_forward.3} parent=11 // pred_check
        %p164 = pneg %p118
      $region18: #{texture_gen_forward.3} parent=11 // pred_check_branch
        %166 = sbr.rel (%p164) target = $region20
      $region19: #{texture_gen_forward.3} parent=11 // pred_region
        _
      $region20: #{texture_gen_forward.3} parent=11 // pred_fallthru
        _
    $region12: #{texture_gen_forward.3} parent=5 // pred_fallthru
      _
    %p167 = scmp.lt.s32.totalorder %s10, 2
    // Predicated region
    $region21: #{texture_gen_forward.3} parent=5 // pred_check
      %p168 = pneg %p167
    $region22: #{texture_gen_forward.3} parent=5 // pred_check_branch
      %170 = sbr.rel (%p168) target = $region24
    $region23: #{texture_gen_forward.3} parent=5 // pred_region
      // Predicated region
      $region25: #{texture_gen_forward.3} parent=23 // pred_check
        %p171 = pneg %p44
      $region26: #{texture_gen_forward.3} parent=23 // pred_check_branch
        %173 = sbr.rel (%p171) target = $region28
      $region27: #{texture_gen_forward.3} parent=23 // pred_region
        %s174 = smul.u32 2, %s18
        %p175 = scmp.lt.s32.totalorder %s17, 1
        %s176 = scalar_select %p175, %s17, 1
        %p177 = scmp.lt.s32.totalorder %s174, 1
        %s178 = scalar_select %p177, %s174, 1
        %s179 = smul.addr %s176, 2
        %s180 = sadd.s32 %s178, %s179
        %s181 = smul.addr %s180, 2
        %s182 = scalar_lea.vmem %s0, %s181
        %s183 = smul.u32 2, %s18
      $region28: #{texture_gen_forward.3} parent=23 // pred_fallthru
        _
      // Predicated region
      $region29: #{texture_gen_forward.3} parent=23 // pred_check
        %p184 = pneg %p70
      $region30: #{texture_gen_forward.3} parent=23 // pred_check_branch
        %186 = sbr.rel (%p184) target = $region32
      $region31: #{texture_gen_forward.3} parent=23 // pred_region
        %p187 = scmp.lt.s32.totalorder %s17, 7
        %s188 = scalar_select %p187, %s17, 7
        %s189 = smul.addr %s188, 16
        %s190 = smul.addr %s189, 8
        %s191 = scalar_lea.vmem %s1, %s190
      $region32: #{texture_gen_forward.3} parent=23 // pred_fallthru
        _
    $region24: #{texture_gen_forward.3} parent=5 // pred_fallthru
      _
    %p192 = scmp.le.s32.totalorder 1, %s10
    %p193 = scmp.lt.s32.totalorder %s10, 3
    %p194 = pnand %p192, %p193
    %p195 = pneg %p194
    // Predicated region
    $region33: #{texture_gen_forward.3} parent=5 // pred_check
      _
    $region34: #{texture_gen_forward.3} parent=5 // pred_check_branch
      %197 = sbr.rel (%p194) target = $region36
    $region35: #{texture_gen_forward.3} parent=5 // pred_region
      %s198 = ssub.s32 %s10, 1
      %s199 = smul.u32 2, %s20
      %p200 = scmp.lt.s32.totalorder %s19, 1
      %s201 = scalar_select %p200, %s19, 1
      %p202 = scmp.lt.s32.totalorder %s199, 1
      %s203 = scalar_select %p202, %s199, 1
      %s204 = smul.addr %s201, 2
      %s205 = sadd.s32 %s203, %s204
      %s206 = smul.addr %s205, 2
      %s207 = scalar_lea.vmem %s0, %s206
      %p208 = pneg %p50
      %p209 = pneg %p47
      %p210 = scmp.lt.s32.totalorder %s19, 7
      %s211 = scalar_select %p210, %s19, 7
      %s212 = smul.addr %s211, 16
      %s213 = smul.addr %s212, 8
      %s214 = scalar_lea.vmem %s1, %s213
      %p215 = pneg %p76
      %p216 = pneg %p73
      %p217 = pneg %p97
      %p218 = pneg %p94
      %p219 = pneg %p118
      %p220 = pneg %p115
      %p221 = pneg %p146
      %p222 = pneg %p143
      %s223 = smul.u32 2, %s20
      %p224 = scmp.lt.s32.totalorder %s19, 1
      %s225 = scalar_select %p224, %s19, 1
      %p226 = scmp.lt.s32.totalorder %s223, 1
      %s227 = scalar_select %p226, %s223, 1
      %s228 = smul.addr %s225, 2
      %s229 = sadd.s32 %s227, %s228
      %s230 = smul.addr %s229, 4
      %s231 = scalar_lea.vmem %s4, %s230
      %s232 = smul.u32 2, %s20
      %p233 = scmp.lt.s32.totalorder %s19, 1
      %s234 = scalar_select %p233, %s19, 1
      %p235 = scmp.lt.s32.totalorder %s232, 1
      %s236 = scalar_select %p235, %s232, 1
      %s237 = smul.addr %s234, 2
      %s238 = sadd.s32 %s236, %s237
      %s239 = smul.addr %s238, 2
      %s240 = scalar_lea.vmem %s0, %s239
      %s241 = smul.u32 2, %s20
      %p242 = scmp.lt.s32.totalorder %s19, 7
      %s243 = scalar_select %p242, %s19, 7
      %s244 = smul.addr %s243, 16
      %s245 = smul.addr %s244, 8
      %s246 = scalar_lea.vmem %s1, %s245
      %s247 = smul.u32 2, %s20
      %p248 = scmp.lt.s32.totalorder %s19, 1
      %s249 = scalar_select %p248, %s19, 1
      %p250 = scmp.lt.s32.totalorder %s247, 1
      %s251 = scalar_select %p250, %s247, 1
      %s252 = smul.addr %s249, 2
      %s253 = sadd.s32 %s251, %s252
      %s254 = smul.addr %s253, 4
      %s255 = scalar_lea.vmem %s4, %s254
      %s256 = smul.u32 2, %s20
      %v258 = vld [vmem:[%s240] sm:$0xf]
      %v259 = vld [vmem:[%s246] sm:$0xff]
      %v260 = vld [vmem:[%s246 + $0x8] sm:$0xff]
      %v261 = vld [vmem:[%s246 + $0x10] sm:$0xff]
      %v262 = vld [vmem:[%s246 + $0x18] sm:$0xff]
      %v263 = vld [vmem:[%s246 + $0x20] sm:$0xff]
      %v264 = vld [vmem:[%s246 + $0x28] sm:$0xff]
      %v265 = vld [vmem:[%s246 + $0x30] sm:$0xff]
      %v266 = vld [vmem:[%s246 + $0x38] sm:$0xff]
      %v267 = vld [vmem:[%s246 + $0x40] sm:$0xff]
      %v268 = vld [vmem:[%s246 + $0x48] sm:$0xff]
      %v269 = vld [vmem:[%s246 + $0x50] sm:$0xff]
      %v270 = vld [vmem:[%s246 + $0x58] sm:$0xff]
      %v271 = vld [vmem:[%s246 + $0x60] sm:$0xff]
      %v272 = vld [vmem:[%s2] sm:$0xf]
      %v273 = vld [vmem:[%s2 + $0x4] sm:$0xf]
      %v274 = vld [vmem:[%s2 + $0x8] sm:$0xf]
      %v275 = vld [vmem:[%s2 + $0xc] sm:$0xf]
      %v276 = vld [vmem:[%s2 + $0x10] sm:$0xf]
      %v277 = vld [vmem:[%s2 + $0x14] sm:$0xf]
      %v278 = vld [vmem:[%s2 + $0x18] sm:$0xf]
      %v279 = vld [vmem:[%s2 + $0x1c] sm:$0xf]
      %v280 = vld [vmem:[%s2 + $0x20] sm:$0xf]
      %v281 = vld [vmem:[%s2 + $0x24] sm:$0xf]
      %v282 = vld [vmem:[%s2 + $0x28] sm:$0xf]
      %v283 = vld [vmem:[%s2 + $0x2c] sm:$0xf]
      %v284 = vld [vmem:[%s2 + $0x30] sm:$0xf]
      %v285 = vld [vmem:[%s2 + $0x34] sm:$0xf]
      %v286 = vld [vmem:[%s2 + $0x38] sm:$0xf]
      %v287 = vld [vmem:[%s2 + $0x3c] sm:$0xf]
      %v288 = vld [vmem:[%s2 + $0x40] sm:$0xf]
      %v289 = vld [vmem:[%s2 + $0x44] sm:$0xf]
      %v290 = vld [vmem:[%s2 + $0x48] sm:$0xf]
      %v291 = vld [vmem:[%s2 + $0x4c] sm:$0xf]
      %v292 = vld [vmem:[%s2 + $0x50] sm:$0xf]
      %v293 = vld [vmem:[%s2 + $0x54] sm:$0xf]
      %v294 = vld [vmem:[%s2 + $0x58] sm:$0xf]
      %v295 = vld [vmem:[%s2 + $0x5c] sm:$0xf]
      %v296 = vld [vmem:[%s3] sm:$0xff]
      %v297 = vld [vmem:[%s3 + $0x8] sm:$0xff]
      %v298 = vld [vmem:[%s3 + $0x10] sm:$0xff]
      %v299 = vld [vmem:[%s3 + $0x18] sm:$0xff]
      %v300 = vld [vmem:[%s3 + $0x20] sm:$0xff]
      %v301 = vld [vmem:[%s3 + $0x28] sm:$0xff]
      %v302 = vld [vmem:[%s3 + $0x30] sm:$0xff]
      %v303 = vld [vmem:[%s3 + $0x38] sm:$0xff]
      %305 = vset.pattern.permute.xlu0 0
      %306 = vperm.xlu0 %305, %v271
      %v307 = vpop.permute.xlu0 %306
      %v310 = vlaneseq
      %v311 = vshrl.u32 %v310, 7
      %v312 = vsub.s32 0, %v311
      %v313 = vrot.slane %v258, %v312
      %v314 = vlaneseq
      %v315 = vshrl.u32 %v314, 7
      %v316 = vsub.s32 2, %v315
      %v317 = vrot.slane %v258, %v316
      %v320 = vmul.f32 %v307, %v313
      %v321 = vmul.f32 %v307, %v317
      %v322 = vlaneseq
      %v323 = vshrl.u32 %v322, 7
      %v324 = vsub.s32 1, %v323
      %v325 = vrot.slane %v258, %v324
      %v326 = vlaneseq
      %v327 = vshrl.u32 %v326, 7
      %v328 = vsub.s32 3, %v327
      %v329 = vrot.slane %v258, %v328
      %v332 = vmul.f32 %v307, %v325
      %v333 = vmul.f32 %v307, %v329
      %v336 = vrot.slane %v332, 2
      %v337 = vrot.slane %v333, 2
      %v340 = vadd.f32 %v320, %v336
      %v341 = vadd.f32 %v321, %v337
      %343 = vset.pattern.permute.xlu0 2
      %344 = vperm.xlu0 %343, %v296
      %v345 = vpop.permute.xlu0 %344
      %348 = vset.pattern.permute.xlu0 2
      %349 = vperm.xlu0 %348, %v297
      %v350 = vpop.permute.xlu0 %349
      %353 = vset.pattern.permute.xlu0 2
      %354 = vperm.xlu0 %353, %v298
      %v355 = vpop.permute.xlu0 %354
      %358 = vset.pattern.permute.xlu0 2
      %359 = vperm.xlu0 %358, %v299
      %v360 = vpop.permute.xlu0 %359
      %v362 = vlaneseq
      %v363 = vshrl.u32 %v362, 7
      %v364 = vsub.s32 0, %v363
      %v365 = vrot.slane %v340, %v364
      %v366 = vlaneseq
      %v367 = vshrl.u32 %v366, 7
      %v368 = vsub.s32 0, %v367
      %v369 = vrot.slane %v341, %v368
      %v370 = vmul.f32 %v345, %v365
      %v371 = vmul.f32 %v345, %v369
      %v372 = vmul.f32 %v350, %v365
      %v373 = vmul.f32 %v350, %v369
      %v374 = vmul.f32 %v355, %v365
      %v375 = vmul.f32 %v355, %v369
      %v376 = vmul.f32 %v360, %v365
      %v377 = vmul.f32 %v360, %v369
      %378 = vset.pattern.permute.xlu0 3
      %379 = vperm.xlu0 %378, %v296
      %v380 = vpop.permute.xlu0 %379
      %382 = vset.pattern.permute.xlu0 3
      %383 = vperm.xlu0 %382, %v297
      %v384 = vpop.permute.xlu0 %383
      %386 = vset.pattern.permute.xlu0 3
      %387 = vperm.xlu0 %386, %v298
      %v388 = vpop.permute.xlu0 %387
      %390 = vset.pattern.permute.xlu0 3
      %391 = vperm.xlu0 %390, %v299
      %v392 = vpop.permute.xlu0 %391
      %v394 = vlaneseq
      %v395 = vshrl.u32 %v394, 7
      %v396 = vsub.s32 1, %v395
      %v397 = vrot.slane %v340, %v396
      %v398 = vlaneseq
      %v399 = vshrl.u32 %v398, 7
      %v400 = vsub.s32 1, %v399
      %v401 = vrot.slane %v341, %v400
      %v402 = vmul.f32 %v380, %v397
      %v403 = vmul.f32 %v380, %v401
      %v404 = vmul.f32 %v384, %v397
      %v405 = vmul.f32 %v384, %v401
      %v406 = vmul.f32 %v388, %v397
      %v407 = vmul.f32 %v388, %v401
      %v408 = vmul.f32 %v392, %v397
      %v409 = vmul.f32 %v392, %v401
      %v410 = vadd.f32 %v370, %v402
      %v411 = vadd.f32 %v371, %v403
      %v412 = vadd.f32 %v372, %v404
      %v413 = vadd.f32 %v373, %v405
      %v414 = vadd.f32 %v374, %v406
      %v415 = vadd.f32 %v375, %v407
      %v416 = vadd.f32 %v376, %v408
      %v417 = vadd.f32 %v377, %v409
      %419 = vset.pattern.permute.xlu0 0
      %420 = vperm.xlu0 %419, %v267
      %v421 = vpop.permute.xlu0 %420
      %424 = vset.pattern.permute.xlu0 0
      %425 = vperm.xlu0 %424, %v268
      %v426 = vpop.permute.xlu0 %425
      %429 = vset.pattern.permute.xlu0 0
      %430 = vperm.xlu0 %429, %v269
      %v431 = vpop.permute.xlu0 %430
      %434 = vset.pattern.permute.xlu0 0
      %435 = vperm.xlu0 %434, %v270
      %v436 = vpop.permute.xlu0 %435
      %v438 = vadd.f32 %v410, %v421
      %v439 = vadd.f32 %v411, %v421
      %v440 = vadd.f32 %v412, %v426
      %v441 = vadd.f32 %v413, %v426
      %v442 = vadd.f32 %v414, %v431
      %v443 = vadd.f32 %v415, %v431
      %v444 = vadd.f32 %v416, %v436
      %v445 = vadd.f32 %v417, %v436
      %v446 = vand.u32 2147483647, %v438
      %vm447 = vcmp.le.f32.partialorder %v446, 0.7853982
      %vm448 = vcmp.lt.s32.totalorder %v438, 0
      %v449 = vand.u32 %v438, 2139095040
      %v450 = vshrl.u32 %v449, 23
      %v451 = vsub.s32 %v450, 127
      %v452 = vand.u32 2147483647, %v438
      %v453 = vand.u32 %v452, 8388607
      %v454 = vor.u32 %v453, 8388608
      %v455 = vsub.s32 0, %v454
      %v456 = vadd.s32 %v451, 1
      %vm457 = vcmp.gt.s32.totalorder %v456, 0
      %v458 = vsel %vm457, %v456, 0
      %v459 = vshrl.u32 %v458, 5
      %v460 = vand.u32 %v458, 31
      %v461 = vsub.s32 32, %v460
      %v462 = vshrl.u32 683565275, %v461
      %v463 = vshll.u32 683565275, %v460
      %v464 = vshrl.u32 2475754826, %v461
      %v465 = vor.u32 %v463, %v464
      %v466 = vshll.u32 2475754826, %v460
      %v467 = vshrl.u32 2131351028, %v461
      %v468 = vor.u32 %v466, %v467
      %v469 = vshll.u32 2131351028, %v460
      %v470 = vshrl.u32 2102212464, %v461
      %v471 = vor.u32 %v469, %v470
      %v472 = vshll.u32 2102212464, %v460
      %v473 = vshrl.u32 920167782, %v461
      %v474 = vor.u32 %v472, %v473
      %v475 = vshll.u32 920167782, %v460
      %v476 = vshrl.u32 1326507024, %v461
      %v477 = vor.u32 %v475, %v476
      %vm478 = vcmp.lt.s32.totalorder %v459, 1
      %vm479 = vcmp.lt.s32.totalorder %v459, 2
      %vm480 = vcmp.lt.s32.totalorder %v459, 3
      %vm481 = vcmp.lt.s32.totalorder %v459, 4
      %v482 = vsel %vm478, %v462, %v465
      %v483 = vsel %vm481, %v471, 2102212464
      %v484 = vsel %vm480, %v468, %v483
      %v485 = vsel %vm479, %v482, %v484
      %v486 = vsel %vm478, %v465, %v468
      %v487 = vsel %vm481, %v474, 920167782
      %v488 = vsel %vm480, %v471, %v487
      %v489 = vsel %vm479, %v486, %v488
      %v490 = vsel %vm478, %v468, %v471
      %v491 = vsel %vm481, %v477, 1326507024
      %v492 = vsel %vm480, %v474, %v491
      %v493 = vsel %vm479, %v490, %v492
      %v494 = vshll.u32 %v454, 8
      %v495 = vmul.u32.u64.compose %v494, %v493
      %v496 = vextract.low.u32 %v495
      %v497 = vextract.high.u32 %v495
      %v498 = vmul.u32.u64.compose %v494, %v489
      %v499 = vextract.low.u32 %v498
      %v500 = vextract.high.u32 %v498
      %v501 = vmul.u32 %v494, %v485
      %v502 = vadd.s32 %v497, %v499
      %vm503 = vc.u32 %v497, %v499
      %v504 = vadd.s32 %v500, 1
      %v505 = vsel %vm503, %v504, %v500
      %v506 = vadd.s32 %v501, %v505
      %v507 = vadd.s32 %v506, 536870912
      %v508 = vshrl.u32 %v507, 30
      %v509 = vshll.u32 %v508, 30
      %v510 = vsub.s32 %v506, %v509
      %vm511 = vcmp.lt.s32.totalorder %v510, 0
      %v512 = vsub.s32 0, %v510
      %v513 = vsel %vm511, %v512, %v510
      %v514 = vclz %v513
      %v515 = vsub.s32 %v514, 2
      %vm516 = vcmp.gt.s32.totalorder 0, %v515
      %v517 = vsel %vm516, 0, %v515
      %v518 = vsub.s32 32, %v517
      %v519 = vshll.u32 %v510, %v517
      %v520 = vshrl.u32 %v502, %v518
      %v521 = vor.u32 %v519, %v520
      %v522 = vsub.s32 4294967266, %v517
      %v523 = vadd.s32 %v522, 127
      %v524 = vshll.u32 %v523, 23
      %v525 = vor.u32 4788187, %v524
      %v526 = vand.u32 2147483647, %v525
      %v528 = vcvt.s32.f32 %v521
      %v529 = vmul.f32 %v528, %v526
      %v530 = vxor.u32 %v529, 2147483648
      %v531 = vsel %vm448, %v530, %v529
      %v532 = vsub.s32 4, %v508
      %v533 = vsel %vm448, %v532, %v508
      %v534 = vsel %vm447, %v438, %v531
      %v535 = vsel %vm447, 0, %v533
      %v536 = vcosq.f32.pop %v534
      %v537 = vsinq.f32.pop %v534
      %vm538 = vweird.f32 %v438
      %v539 = vadd.s32 %v535, 3
      %v540 = vand.u32 %v539, 3
      %vm541 = vcmp.lt.s32.totalorder %v540, 2
      %vm542 = vcmp.eq.s32.totalorder %v540, 0
      %v543 = vxor.u32 %v537, 2147483648
      %v544 = vsel %vm542, %v536, %v543
      %vm545 = vcmp.eq.s32.totalorder %v540, 2
      %v546 = vxor.u32 %v536, 2147483648
      %v547 = vsel %vm545, %v546, %v537
      %v548 = vsel %vm541, %v544, %v547
      %v549 = vsel %vm538, nan, %v548
      %v550 = vand.u32 2147483647, %v439
      %vm551 = vcmp.le.f32.partialorder %v550, 0.7853982
      %vm552 = vcmp.lt.s32.totalorder %v439, 0
      %v553 = vand.u32 %v439, 2139095040
      %v554 = vshrl.u32 %v553, 23
      %v555 = vsub.s32 %v554, 127
      %v556 = vand.u32 2147483647, %v439
      %v557 = vand.u32 %v556, 8388607
      %v558 = vor.u32 %v557, 8388608
      %v559 = vsub.s32 0, %v558
      %v560 = vadd.s32 %v555, 1
      %vm561 = vcmp.gt.s32.totalorder %v560, 0
      %v562 = vsel %vm561, %v560, 0
      %v563 = vshrl.u32 %v562, 5
      %v564 = vand.u32 %v562, 31
      %v565 = vsub.s32 32, %v564
      %v566 = vshrl.u32 683565275, %v565
      %v567 = vshll.u32 683565275, %v564
      %v568 = vshrl.u32 2475754826, %v565
      %v569 = vor.u32 %v567, %v568
      %v570 = vshll.u32 2475754826, %v564
      %v571 = vshrl.u32 2131351028, %v565
      %v572 = vor.u32 %v570, %v571
      %v573 = vshll.u32 2131351028, %v564
      %v574 = vshrl.u32 2102212464, %v565
      %v575 = vor.u32 %v573, %v574
      %v576 = vshll.u32 2102212464, %v564
      %v577 = vshrl.u32 920167782, %v565
      %v578 = vor.u32 %v576, %v577
      %v579 = vshll.u32 920167782, %v564
      %v580 = vshrl.u32 1326507024, %v565
      %v581 = vor.u32 %v579, %v580
      %vm582 = vcmp.lt.s32.totalorder %v563, 1
      %vm583 = vcmp.lt.s32.totalorder %v563, 2
      %vm584 = vcmp.lt.s32.totalorder %v563, 3
      %vm585 = vcmp.lt.s32.totalorder %v563, 4
      %v586 = vsel %vm582, %v566, %v569
      %v587 = vsel %vm585, %v575, 2102212464
      %v588 = vsel %vm584, %v572, %v587
      %v589 = vsel %vm583, %v586, %v588
      %v590 = vsel %vm582, %v569, %v572
      %v591 = vsel %vm585, %v578, 920167782
      %v592 = vsel %vm584, %v575, %v591
      %v593 = vsel %vm583, %v590, %v592
      %v594 = vsel %vm582, %v572, %v575
      %v595 = vsel %vm585, %v581, 1326507024
      %v596 = vsel %vm584, %v578, %v595
      %v597 = vsel %vm583, %v594, %v596
      %v598 = vshll.u32 %v558, 8
      %v599 = vmul.u32.u64.compose %v598, %v597
      %v600 = vextract.low.u32 %v599
      %v601 = vextract.high.u32 %v599
      %v602 = vmul.u32.u64.compose %v598, %v593
      %v603 = vextract.low.u32 %v602
      %v604 = vextract.high.u32 %v602
      %v605 = vmul.u32 %v598, %v589
      %v606 = vadd.s32 %v601, %v603
      %vm607 = vc.u32 %v601, %v603
      %v608 = vadd.s32 %v604, 1
      %v609 = vsel %vm607, %v608, %v604
      %v610 = vadd.s32 %v605, %v609
      %v611 = vadd.s32 %v610, 536870912
      %v612 = vshrl.u32 %v611, 30
      %v613 = vshll.u32 %v612, 30
      %v614 = vsub.s32 %v610, %v613
      %vm615 = vcmp.lt.s32.totalorder %v614, 0
      %v616 = vsub.s32 0, %v614
      %v617 = vsel %vm615, %v616, %v614
      %v618 = vclz %v617
      %v619 = vsub.s32 %v618, 2
      %vm620 = vcmp.gt.s32.totalorder 0, %v619
      %v621 = vsel %vm620, 0, %v619
      %v622 = vsub.s32 32, %v621
      %v623 = vshll.u32 %v614, %v621
      %v624 = vshrl.u32 %v606, %v622
      %v625 = vor.u32 %v623, %v624
      %v626 = vsub.s32 4294967266, %v621
      %v627 = vadd.s32 %v626, 127
      %v628 = vshll.u32 %v627, 23
      %v629 = vor.u32 4788187, %v628
      %v630 = vand.u32 2147483647, %v629
      %v632 = vcvt.s32.f32 %v625
      %v633 = vmul.f32 %v632, %v630
      %v634 = vxor.u32 %v633, 2147483648
      %v635 = vsel %vm552, %v634, %v633
      %v636 = vsub.s32 4, %v612
      %v637 = vsel %vm552, %v636, %v612
      %v638 = vsel %vm551, %v439, %v635
      %v639 = vsel %vm551, 0, %v637
      %v640 = vcosq.f32.pop %v638
      %v641 = vsinq.f32.pop %v638
      %vm642 = vweird.f32 %v439
      %v643 = vadd.s32 %v639, 3
      %v644 = vand.u32 %v643, 3
      %vm645 = vcmp.lt.s32.totalorder %v644, 2
      %vm646 = vcmp.eq.s32.totalorder %v644, 0
      %v647 = vxor.u32 %v641, 2147483648
      %v648 = vsel %vm646, %v640, %v647
      %vm649 = vcmp.eq.s32.totalorder %v644, 2
      %v650 = vxor.u32 %v640, 2147483648
      %v651 = vsel %vm649, %v650, %v641
      %v652 = vsel %vm645, %v648, %v651
      %v653 = vsel %vm642, nan, %v652
      %v654 = vand.u32 2147483647, %v440
      %vm655 = vcmp.le.f32.partialorder %v654, 0.7853982
      %vm656 = vcmp.lt.s32.totalorder %v440, 0
      %v657 = vand.u32 %v440, 2139095040
      %v658 = vshrl.u32 %v657, 23
      %v659 = vsub.s32 %v658, 127
      %v660 = vand.u32 2147483647, %v440
      %v661 = vand.u32 %v660, 8388607
      %v662 = vor.u32 %v661, 8388608
      %v663 = vsub.s32 0, %v662
      %v664 = vadd.s32 %v659, 1
      %vm665 = vcmp.gt.s32.totalorder %v664, 0
      %v666 = vsel %vm665, %v664, 0
      %v667 = vshrl.u32 %v666, 5
      %v668 = vand.u32 %v666, 31
      %v669 = vsub.s32 32, %v668
      %v670 = vshrl.u32 683565275, %v669
      %v671 = vshll.u32 683565275, %v668
      %v672 = vshrl.u32 2475754826, %v669
      %v673 = vor.u32 %v671, %v672
      %v674 = vshll.u32 2475754826, %v668
      %v675 = vshrl.u32 2131351028, %v669
      %v676 = vor.u32 %v674, %v675
      %v677 = vshll.u32 2131351028, %v668
      %v678 = vshrl.u32 2102212464, %v669
      %v679 = vor.u32 %v677, %v678
      %v680 = vshll.u32 2102212464, %v668
      %v681 = vshrl.u32 920167782, %v669
      %v682 = vor.u32 %v680, %v681
      %v683 = vshll.u32 920167782, %v668
      %v684 = vshrl.u32 1326507024, %v669
      %v685 = vor.u32 %v683, %v684
      %vm686 = vcmp.lt.s32.totalorder %v667, 1
      %vm687 = vcmp.lt.s32.totalorder %v667, 2
      %vm688 = vcmp.lt.s32.totalorder %v667, 3
      %vm689 = vcmp.lt.s32.totalorder %v667, 4
      %v690 = vsel %vm686, %v670, %v673
      %v691 = vsel %vm689, %v679, 2102212464
      %v692 = vsel %vm688, %v676, %v691
      %v693 = vsel %vm687, %v690, %v692
      %v694 = vsel %vm686, %v673, %v676
      %v695 = vsel %vm689, %v682, 920167782
      %v696 = vsel %vm688, %v679, %v695
      %v697 = vsel %vm687, %v694, %v696
      %v698 = vsel %vm686, %v676, %v679
      %v699 = vsel %vm689, %v685, 1326507024
      %v700 = vsel %vm688, %v682, %v699
      %v701 = vsel %vm687, %v698, %v700
      %v702 = vshll.u32 %v662, 8
      %v703 = vmul.u32.u64.compose %v702, %v701
      %v704 = vextract.low.u32 %v703
      %v705 = vextract.high.u32 %v703
      %v706 = vmul.u32.u64.compose %v702, %v697
      %v707 = vextract.low.u32 %v706
      %v708 = vextract.high.u32 %v706
      %v709 = vmul.u32 %v702, %v693
      %v710 = vadd.s32 %v705, %v707
      %vm711 = vc.u32 %v705, %v707
      %v712 = vadd.s32 %v708, 1
      %v713 = vsel %vm711, %v712, %v708
      %v714 = vadd.s32 %v709, %v713
      %v715 = vadd.s32 %v714, 536870912
      %v716 = vshrl.u32 %v715, 30
      %v717 = vshll.u32 %v716, 30
      %v718 = vsub.s32 %v714, %v717
      %vm719 = vcmp.lt.s32.totalorder %v718, 0
      %v720 = vsub.s32 0, %v718
      %v721 = vsel %vm719, %v720, %v718
      %v722 = vclz %v721
      %v723 = vsub.s32 %v722, 2
      %vm724 = vcmp.gt.s32.totalorder 0, %v723
      %v725 = vsel %vm724, 0, %v723
      %v726 = vsub.s32 32, %v725
      %v727 = vshll.u32 %v718, %v725
      %v728 = vshrl.u32 %v710, %v726
      %v729 = vor.u32 %v727, %v728
      %v730 = vsub.s32 4294967266, %v725
      %v731 = vadd.s32 %v730, 127
      %v732 = vshll.u32 %v731, 23
      %v733 = vor.u32 4788187, %v732
      %v734 = vand.u32 2147483647, %v733
      %v736 = vcvt.s32.f32 %v729
      %v737 = vmul.f32 %v736, %v734
      %v738 = vxor.u32 %v737, 2147483648
      %v739 = vsel %vm656, %v738, %v737
      %v740 = vsub.s32 4, %v716
      %v741 = vsel %vm656, %v740, %v716
      %v742 = vsel %vm655, %v440, %v739
      %v743 = vsel %vm655, 0, %v741
      %v744 = vcosq.f32.pop %v742
      %v745 = vsinq.f32.pop %v742
      %vm746 = vweird.f32 %v440
      %v747 = vadd.s32 %v743, 3
      %v748 = vand.u32 %v747, 3
      %vm749 = vcmp.lt.s32.totalorder %v748, 2
      %vm750 = vcmp.eq.s32.totalorder %v748, 0
      %v751 = vxor.u32 %v745, 2147483648
      %v752 = vsel %vm750, %v744, %v751
      %vm753 = vcmp.eq.s32.totalorder %v748, 2
      %v754 = vxor.u32 %v744, 2147483648
      %v755 = vsel %vm753, %v754, %v745
      %v756 = vsel %vm749, %v752, %v755
      %v757 = vsel %vm746, nan, %v756
      %v758 = vand.u32 2147483647, %v441
      %vm759 = vcmp.le.f32.partialorder %v758, 0.7853982
      %vm760 = vcmp.lt.s32.totalorder %v441, 0
      %v761 = vand.u32 %v441, 2139095040
      %v762 = vshrl.u32 %v761, 23
      %v763 = vsub.s32 %v762, 127
      %v764 = vand.u32 2147483647, %v441
      %v765 = vand.u32 %v764, 8388607
      %v766 = vor.u32 %v765, 8388608
      %v767 = vsub.s32 0, %v766
      %v768 = vadd.s32 %v763, 1
      %vm769 = vcmp.gt.s32.totalorder %v768, 0
      %v770 = vsel %vm769, %v768, 0
      %v771 = vshrl.u32 %v770, 5
      %v772 = vand.u32 %v770, 31
      %v773 = vsub.s32 32, %v772
      %v774 = vshrl.u32 683565275, %v773
      %v775 = vshll.u32 683565275, %v772
      %v776 = vshrl.u32 2475754826, %v773
      %v777 = vor.u32 %v775, %v776
      %v778 = vshll.u32 2475754826, %v772
      %v779 = vshrl.u32 2131351028, %v773
      %v780 = vor.u32 %v778, %v779
      %v781 = vshll.u32 2131351028, %v772
      %v782 = vshrl.u32 2102212464, %v773
      %v783 = vor.u32 %v781, %v782
      %v784 = vshll.u32 2102212464, %v772
      %v785 = vshrl.u32 920167782, %v773
      %v786 = vor.u32 %v784, %v785
      %v787 = vshll.u32 920167782, %v772
      %v788 = vshrl.u32 1326507024, %v773
      %v789 = vor.u32 %v787, %v788
      %vm790 = vcmp.lt.s32.totalorder %v771, 1
      %vm791 = vcmp.lt.s32.totalorder %v771, 2
      %vm792 = vcmp.lt.s32.totalorder %v771, 3
      %vm793 = vcmp.lt.s32.totalorder %v771, 4
      %v794 = vsel %vm790, %v774, %v777
      %v795 = vsel %vm793, %v783, 2102212464
      %v796 = vsel %vm792, %v780, %v795
      %v797 = vsel %vm791, %v794, %v796
      %v798 = vsel %vm790, %v777, %v780
      %v799 = vsel %vm793, %v786, 920167782
      %v800 = vsel %vm792, %v783, %v799
      %v801 = vsel %vm791, %v798, %v800
      %v802 = vsel %vm790, %v780, %v783
      %v803 = vsel %vm793, %v789, 1326507024
      %v804 = vsel %vm792, %v786, %v803
      %v805 = vsel %vm791, %v802, %v804
      %v806 = vshll.u32 %v766, 8
      %v807 = vmul.u32.u64.compose %v806, %v805
      %v808 = vextract.low.u32 %v807
      %v809 = vextract.high.u32 %v807
      %v810 = vmul.u32.u64.compose %v806, %v801
      %v811 = vextract.low.u32 %v810
      %v812 = vextract.high.u32 %v810
      %v813 = vmul.u32 %v806, %v797
      %v814 = vadd.s32 %v809, %v811
      %vm815 = vc.u32 %v809, %v811
      %v816 = vadd.s32 %v812, 1
      %v817 = vsel %vm815, %v816, %v812
      %v818 = vadd.s32 %v813, %v817
      %v819 = vadd.s32 %v818, 536870912
      %v820 = vshrl.u32 %v819, 30
      %v821 = vshll.u32 %v820, 30
      %v822 = vsub.s32 %v818, %v821
      %vm823 = vcmp.lt.s32.totalorder %v822, 0
      %v824 = vsub.s32 0, %v822
      %v825 = vsel %vm823, %v824, %v822
      %v826 = vclz %v825
      %v827 = vsub.s32 %v826, 2
      %vm828 = vcmp.gt.s32.totalorder 0, %v827
      %v829 = vsel %vm828, 0, %v827
      %v830 = vsub.s32 32, %v829
      %v831 = vshll.u32 %v822, %v829
      %v832 = vshrl.u32 %v814, %v830
      %v833 = vor.u32 %v831, %v832
      %v834 = vsub.s32 4294967266, %v829
      %v835 = vadd.s32 %v834, 127
      %v836 = vshll.u32 %v835, 23
      %v837 = vor.u32 4788187, %v836
      %v838 = vand.u32 2147483647, %v837
      %v840 = vcvt.s32.f32 %v833
      %v841 = vmul.f32 %v840, %v838
      %v842 = vxor.u32 %v841, 2147483648
      %v843 = vsel %vm760, %v842, %v841
      %v844 = vsub.s32 4, %v820
      %v845 = vsel %vm760, %v844, %v820
      %v846 = vsel %vm759, %v441, %v843
      %v847 = vsel %vm759, 0, %v845
      %v848 = vcosq.f32.pop %v846
      %v849 = vsinq.f32.pop %v846
      %vm850 = vweird.f32 %v441
      %v851 = vadd.s32 %v847, 3
      %v852 = vand.u32 %v851, 3
      %vm853 = vcmp.lt.s32.totalorder %v852, 2
      %vm854 = vcmp.eq.s32.totalorder %v852, 0
      %v855 = vxor.u32 %v849, 2147483648
      %v856 = vsel %vm854, %v848, %v855
      %vm857 = vcmp.eq.s32.totalorder %v852, 2
      %v858 = vxor.u32 %v848, 2147483648
      %v859 = vsel %vm857, %v858, %v849
      %v860 = vsel %vm853, %v856, %v859
      %v861 = vsel %vm850, nan, %v860
      %v862 = vand.u32 2147483647, %v442
      %vm863 = vcmp.le.f32.partialorder %v862, 0.7853982
      %vm864 = vcmp.lt.s32.totalorder %v442, 0
      %v865 = vand.u32 %v442, 2139095040
      %v866 = vshrl.u32 %v865, 23
      %v867 = vsub.s32 %v866, 127
      %v868 = vand.u32 2147483647, %v442
      %v869 = vand.u32 %v868, 8388607
      %v870 = vor.u32 %v869, 8388608
      %v871 = vsub.s32 0, %v870
      %v872 = vadd.s32 %v867, 1
      %vm873 = vcmp.gt.s32.totalorder %v872, 0
      %v874 = vsel %vm873, %v872, 0
      %v875 = vshrl.u32 %v874, 5
      %v876 = vand.u32 %v874, 31
      %v877 = vsub.s32 32, %v876
      %v878 = vshrl.u32 683565275, %v877
      %v879 = vshll.u32 683565275, %v876
      %v880 = vshrl.u32 2475754826, %v877
      %v881 = vor.u32 %v879, %v880
      %v882 = vshll.u32 2475754826, %v876
      %v883 = vshrl.u32 2131351028, %v877
      %v884 = vor.u32 %v882, %v883
      %v885 = vshll.u32 2131351028, %v876
      %v886 = vshrl.u32 2102212464, %v877
      %v887 = vor.u32 %v885, %v886
      %v888 = vshll.u32 2102212464, %v876
      %v889 = vshrl.u32 920167782, %v877
      %v890 = vor.u32 %v888, %v889
      %v891 = vshll.u32 920167782, %v876
      %v892 = vshrl.u32 1326507024, %v877
      %v893 = vor.u32 %v891, %v892
      %vm894 = vcmp.lt.s32.totalorder %v875, 1
      %vm895 = vcmp.lt.s32.totalorder %v875, 2
      %vm896 = vcmp.lt.s32.totalorder %v875, 3
      %vm897 = vcmp.lt.s32.totalorder %v875, 4
      %v898 = vsel %vm894, %v878, %v881
      %v899 = vsel %vm897, %v887, 2102212464
      %v900 = vsel %vm896, %v884, %v899
      %v901 = vsel %vm895, %v898, %v900
      %v902 = vsel %vm894, %v881, %v884
      %v903 = vsel %vm897, %v890, 920167782
      %v904 = vsel %vm896, %v887, %v903
      %v905 = vsel %vm895, %v902, %v904
      %v906 = vsel %vm894, %v884, %v887
      %v907 = vsel %vm897, %v893, 1326507024
      %v908 = vsel %vm896, %v890, %v907
      %v909 = vsel %vm895, %v906, %v908
      %v910 = vshll.u32 %v870, 8
      %v911 = vmul.u32.u64.compose %v910, %v909
      %v912 = vextract.low.u32 %v911
      %v913 = vextract.high.u32 %v911
      %v914 = vmul.u32.u64.compose %v910, %v905
      %v915 = vextract.low.u32 %v914
      %v916 = vextract.high.u32 %v914
      %v917 = vmul.u32 %v910, %v901
      %v918 = vadd.s32 %v913, %v915
      %vm919 = vc.u32 %v913, %v915
      %v920 = vadd.s32 %v916, 1
      %v921 = vsel %vm919, %v920, %v916
      %v922 = vadd.s32 %v917, %v921
      %v923 = vadd.s32 %v922, 536870912
      %v924 = vshrl.u32 %v923, 30
      %v925 = vshll.u32 %v924, 30
      %v926 = vsub.s32 %v922, %v925
      %vm927 = vcmp.lt.s32.totalorder %v926, 0
      %v928 = vsub.s32 0, %v926
      %v929 = vsel %vm927, %v928, %v926
      %v930 = vclz %v929
      %v931 = vsub.s32 %v930, 2
      %vm932 = vcmp.gt.s32.totalorder 0, %v931
      %v933 = vsel %vm932, 0, %v931
      %v934 = vsub.s32 32, %v933
      %v935 = vshll.u32 %v926, %v933
      %v936 = vshrl.u32 %v918, %v934
      %v937 = vor.u32 %v935, %v936
      %v938 = vsub.s32 4294967266, %v933
      %v939 = vadd.s32 %v938, 127
      %v940 = vshll.u32 %v939, 23
      %v941 = vor.u32 4788187, %v940
      %v942 = vand.u32 2147483647, %v941
      %v944 = vcvt.s32.f32 %v937
      %v945 = vmul.f32 %v944, %v942
      %v946 = vxor.u32 %v945, 2147483648
      %v947 = vsel %vm864, %v946, %v945
      %v948 = vsub.s32 4, %v924
      %v949 = vsel %vm864, %v948, %v924
      %v950 = vsel %vm863, %v442, %v947
      %v951 = vsel %vm863, 0, %v949
      %v952 = vcosq.f32.pop %v950
      %v953 = vsinq.f32.pop %v950
      %vm954 = vweird.f32 %v442
      %v955 = vadd.s32 %v951, 3
      %v956 = vand.u32 %v955, 3
      %vm957 = vcmp.lt.s32.totalorder %v956, 2
      %vm958 = vcmp.eq.s32.totalorder %v956, 0
      %v959 = vxor.u32 %v953, 2147483648
      %v960 = vsel %vm958, %v952, %v959
      %vm961 = vcmp.eq.s32.totalorder %v956, 2
      %v962 = vxor.u32 %v952, 2147483648
      %v963 = vsel %vm961, %v962, %v953
      %v964 = vsel %vm957, %v960, %v963
      %v965 = vsel %vm954, nan, %v964
      %v966 = vand.u32 2147483647, %v443
      %vm967 = vcmp.le.f32.partialorder %v966, 0.7853982
      %vm968 = vcmp.lt.s32.totalorder %v443, 0
      %v969 = vand.u32 %v443, 2139095040
      %v970 = vshrl.u32 %v969, 23
      %v971 = vsub.s32 %v970, 127
      %v972 = vand.u32 2147483647, %v443
      %v973 = vand.u32 %v972, 8388607
      %v974 = vor.u32 %v973, 8388608
      %v975 = vsub.s32 0, %v974
      %v976 = vadd.s32 %v971, 1
      %vm977 = vcmp.gt.s32.totalorder %v976, 0
      %v978 = vsel %vm977, %v976, 0
      %v979 = vshrl.u32 %v978, 5
      %v980 = vand.u32 %v978, 31
      %v981 = vsub.s32 32, %v980
      %v982 = vshrl.u32 683565275, %v981
      %v983 = vshll.u32 683565275, %v980
      %v984 = vshrl.u32 2475754826, %v981
      %v985 = vor.u32 %v983, %v984
      %v986 = vshll.u32 2475754826, %v980
      %v987 = vshrl.u32 2131351028, %v981
      %v988 = vor.u32 %v986, %v987
      %v989 = vshll.u32 2131351028, %v980
      %v990 = vshrl.u32 2102212464, %v981
      %v991 = vor.u32 %v989, %v990
      %v992 = vshll.u32 2102212464, %v980
      %v993 = vshrl.u32 920167782, %v981
      %v994 = vor.u32 %v992, %v993
      %v995 = vshll.u32 920167782, %v980
      %v996 = vshrl.u32 1326507024, %v981
      %v997 = vor.u32 %v995, %v996
      %vm998 = vcmp.lt.s32.totalorder %v979, 1
      %vm999 = vcmp.lt.s32.totalorder %v979, 2
      %vm1000 = vcmp.lt.s32.totalorder %v979, 3
      %vm1001 = vcmp.lt.s32.totalorder %v979, 4
      %v1002 = vsel %vm998, %v982, %v985
      %v1003 = vsel %vm1001, %v991, 2102212464
      %v1004 = vsel %vm1000, %v988, %v1003
      %v1005 = vsel %vm999, %v1002, %v1004
      %v1006 = vsel %vm998, %v985, %v988
      %v1007 = vsel %vm1001, %v994, 920167782
      %v1008 = vsel %vm1000, %v991, %v1007
      %v1009 = vsel %vm999, %v1006, %v1008
      %v1010 = vsel %vm998, %v988, %v991
      %v1011 = vsel %vm1001, %v997, 1326507024
      %v1012 = vsel %vm1000, %v994, %v1011
      %v1013 = vsel %vm999, %v1010, %v1012
      %v1014 = vshll.u32 %v974, 8
      %v1015 = vmul.u32.u64.compose %v1014, %v1013
      %v1016 = vextract.low.u32 %v1015
      %v1017 = vextract.high.u32 %v1015
      %v1018 = vmul.u32.u64.compose %v1014, %v1009
      %v1019 = vextract.low.u32 %v1018
      %v1020 = vextract.high.u32 %v1018
      %v1021 = vmul.u32 %v1014, %v1005
      %v1022 = vadd.s32 %v1017, %v1019
      %vm1023 = vc.u32 %v1017, %v1019
      %v1024 = vadd.s32 %v1020, 1
      %v1025 = vsel %vm1023, %v1024, %v1020
      %v1026 = vadd.s32 %v1021, %v1025
      %v1027 = vadd.s32 %v1026, 536870912
      %v1028 = vshrl.u32 %v1027, 30
      %v1029 = vshll.u32 %v1028, 30
      %v1030 = vsub.s32 %v1026, %v1029
      %vm1031 = vcmp.lt.s32.totalorder %v1030, 0
      %v1032 = vsub.s32 0, %v1030
      %v1033 = vsel %vm1031, %v1032, %v1030
      %v1034 = vclz %v1033
      %v1035 = vsub.s32 %v1034, 2
      %vm1036 = vcmp.gt.s32.totalorder 0, %v1035
      %v1037 = vsel %vm1036, 0, %v1035
      %v1038 = vsub.s32 32, %v1037
      %v1039 = vshll.u32 %v1030, %v1037
      %v1040 = vshrl.u32 %v1022, %v1038
      %v1041 = vor.u32 %v1039, %v1040
      %v1042 = vsub.s32 4294967266, %v1037
      %v1043 = vadd.s32 %v1042, 127
      %v1044 = vshll.u32 %v1043, 23
      %v1045 = vor.u32 4788187, %v1044
      %v1046 = vand.u32 2147483647, %v1045
      %v1048 = vcvt.s32.f32 %v1041
      %v1049 = vmul.f32 %v1048, %v1046
      %v1050 = vxor.u32 %v1049, 2147483648
      %v1051 = vsel %vm968, %v1050, %v1049
      %v1052 = vsub.s32 4, %v1028
      %v1053 = vsel %vm968, %v1052, %v1028
      %v1054 = vsel %vm967, %v443, %v1051
      %v1055 = vsel %vm967, 0, %v1053
      %v1056 = vcosq.f32.pop %v1054
      %v1057 = vsinq.f32.pop %v1054
      %vm1058 = vweird.f32 %v443
      %v1059 = vadd.s32 %v1055, 3
      %v1060 = vand.u32 %v1059, 3
      %vm1061 = vcmp.lt.s32.totalorder %v1060, 2
      %vm1062 = vcmp.eq.s32.totalorder %v1060, 0
      %v1063 = vxor.u32 %v1057, 2147483648
      %v1064 = vsel %vm1062, %v1056, %v1063
      %vm1065 = vcmp.eq.s32.totalorder %v1060, 2
      %v1066 = vxor.u32 %v1056, 2147483648
      %v1067 = vsel %vm1065, %v1066, %v1057
      %v1068 = vsel %vm1061, %v1064, %v1067
      %v1069 = vsel %vm1058, nan, %v1068
      %v1070 = vand.u32 2147483647, %v444
      %vm1071 = vcmp.le.f32.partialorder %v1070, 0.7853982
      %vm1072 = vcmp.lt.s32.totalorder %v444, 0
      %v1073 = vand.u32 %v444, 2139095040
      %v1074 = vshrl.u32 %v1073, 23
      %v1075 = vsub.s32 %v1074, 127
      %v1076 = vand.u32 2147483647, %v444
      %v1077 = vand.u32 %v1076, 8388607
      %v1078 = vor.u32 %v1077, 8388608
      %v1079 = vsub.s32 0, %v1078
      %v1080 = vadd.s32 %v1075, 1
      %vm1081 = vcmp.gt.s32.totalorder %v1080, 0
      %v1082 = vsel %vm1081, %v1080, 0
      %v1083 = vshrl.u32 %v1082, 5
      %v1084 = vand.u32 %v1082, 31
      %v1085 = vsub.s32 32, %v1084
      %v1086 = vshrl.u32 683565275, %v1085
      %v1087 = vshll.u32 683565275, %v1084
      %v1088 = vshrl.u32 2475754826, %v1085
      %v1089 = vor.u32 %v1087, %v1088
      %v1090 = vshll.u32 2475754826, %v1084
      %v1091 = vshrl.u32 2131351028, %v1085
      %v1092 = vor.u32 %v1090, %v1091
      %v1093 = vshll.u32 2131351028, %v1084
      %v1094 = vshrl.u32 2102212464, %v1085
      %v1095 = vor.u32 %v1093, %v1094
      %v1096 = vshll.u32 2102212464, %v1084
      %v1097 = vshrl.u32 920167782, %v1085
      %v1098 = vor.u32 %v1096, %v1097
      %v1099 = vshll.u32 920167782, %v1084
      %v1100 = vshrl.u32 1326507024, %v1085
      %v1101 = vor.u32 %v1099, %v1100
      %vm1102 = vcmp.lt.s32.totalorder %v1083, 1
      %vm1103 = vcmp.lt.s32.totalorder %v1083, 2
      %vm1104 = vcmp.lt.s32.totalorder %v1083, 3
      %vm1105 = vcmp.lt.s32.totalorder %v1083, 4
      %v1106 = vsel %vm1102, %v1086, %v1089
      %v1107 = vsel %vm1105, %v1095, 2102212464
      %v1108 = vsel %vm1104, %v1092, %v1107
      %v1109 = vsel %vm1103, %v1106, %v1108
      %v1110 = vsel %vm1102, %v1089, %v1092
      %v1111 = vsel %vm1105, %v1098, 920167782
      %v1112 = vsel %vm1104, %v1095, %v1111
      %v1113 = vsel %vm1103, %v1110, %v1112
      %v1114 = vsel %vm1102, %v1092, %v1095
      %v1115 = vsel %vm1105, %v1101, 1326507024
      %v1116 = vsel %vm1104, %v1098, %v1115
      %v1117 = vsel %vm1103, %v1114, %v1116
      %v1118 = vshll.u32 %v1078, 8
      %v1119 = vmul.u32.u64.compose %v1118, %v1117
      %v1120 = vextract.low.u32 %v1119
      %v1121 = vextract.high.u32 %v1119
      %v1122 = vmul.u32.u64.compose %v1118, %v1113
      %v1123 = vextract.low.u32 %v1122
      %v1124 = vextract.high.u32 %v1122
      %v1125 = vmul.u32 %v1118, %v1109
      %v1126 = vadd.s32 %v1121, %v1123
      %vm1127 = vc.u32 %v1121, %v1123
      %v1128 = vadd.s32 %v1124, 1
      %v1129 = vsel %vm1127, %v1128, %v1124
      %v1130 = vadd.s32 %v1125, %v1129
      %v1131 = vadd.s32 %v1130, 536870912
      %v1132 = vshrl.u32 %v1131, 30
      %v1133 = vshll.u32 %v1132, 30
      %v1134 = vsub.s32 %v1130, %v1133
      %vm1135 = vcmp.lt.s32.totalorder %v1134, 0
      %v1136 = vsub.s32 0, %v1134
      %v1137 = vsel %vm1135, %v1136, %v1134
      %v1138 = vclz %v1137
      %v1139 = vsub.s32 %v1138, 2
      %vm1140 = vcmp.gt.s32.totalorder 0, %v1139
      %v1141 = vsel %vm1140, 0, %v1139
      %v1142 = vsub.s32 32, %v1141
      %v1143 = vshll.u32 %v1134, %v1141
      %v1144 = vshrl.u32 %v1126, %v1142
      %v1145 = vor.u32 %v1143, %v1144
      %v1146 = vsub.s32 4294967266, %v1141
      %v1147 = vadd.s32 %v1146, 127
      %v1148 = vshll.u32 %v1147, 23
      %v1149 = vor.u32 4788187, %v1148
      %v1150 = vand.u32 2147483647, %v1149
      %v1152 = vcvt.s32.f32 %v1145
      %v1153 = vmul.f32 %v1152, %v1150
      %v1154 = vxor.u32 %v1153, 2147483648
      %v1155 = vsel %vm1072, %v1154, %v1153
      %v1156 = vsub.s32 4, %v1132
      %v1157 = vsel %vm1072, %v1156, %v1132
      %v1158 = vsel %vm1071, %v444, %v1155
      %v1159 = vsel %vm1071, 0, %v1157
      %v1160 = vcosq.f32.pop %v1158
      %v1161 = vsinq.f32.pop %v1158
      %vm1162 = vweird.f32 %v444
      %v1163 = vadd.s32 %v1159, 3
      %v1164 = vand.u32 %v1163, 3
      %vm1165 = vcmp.lt.s32.totalorder %v1164, 2
      %vm1166 = vcmp.eq.s32.totalorder %v1164, 0
      %v1167 = vxor.u32 %v1161, 2147483648
      %v1168 = vsel %vm1166, %v1160, %v1167
      %vm1169 = vcmp.eq.s32.totalorder %v1164, 2
      %v1170 = vxor.u32 %v1160, 2147483648
      %v1171 = vsel %vm1169, %v1170, %v1161
      %v1172 = vsel %vm1165, %v1168, %v1171
      %v1173 = vsel %vm1162, nan, %v1172
      %v1174 = vand.u32 2147483647, %v445
      %vm1175 = vcmp.le.f32.partialorder %v1174, 0.7853982
      %vm1176 = vcmp.lt.s32.totalorder %v445, 0
      %v1177 = vand.u32 %v445, 2139095040
      %v1178 = vshrl.u32 %v1177, 23
      %v1179 = vsub.s32 %v1178, 127
      %v1180 = vand.u32 2147483647, %v445
      %v1181 = vand.u32 %v1180, 8388607
      %v1182 = vor.u32 %v1181, 8388608
      %v1183 = vsub.s32 0, %v1182
      %v1184 = vadd.s32 %v1179, 1
      %vm1185 = vcmp.gt.s32.totalorder %v1184, 0
      %v1186 = vsel %vm1185, %v1184, 0
      %v1187 = vshrl.u32 %v1186, 5
      %v1188 = vand.u32 %v1186, 31
      %v1189 = vsub.s32 32, %v1188
      %v1190 = vshrl.u32 683565275, %v1189
      %v1191 = vshll.u32 683565275, %v1188
      %v1192 = vshrl.u32 2475754826, %v1189
      %v1193 = vor.u32 %v1191, %v1192
      %v1194 = vshll.u32 2475754826, %v1188
      %v1195 = vshrl.u32 2131351028, %v1189
      %v1196 = vor.u32 %v1194, %v1195
      %v1197 = vshll.u32 2131351028, %v1188
      %v1198 = vshrl.u32 2102212464, %v1189
      %v1199 = vor.u32 %v1197, %v1198
      %v1200 = vshll.u32 2102212464, %v1188
      %v1201 = vshrl.u32 920167782, %v1189
      %v1202 = vor.u32 %v1200, %v1201
      %v1203 = vshll.u32 920167782, %v1188
      %v1204 = vshrl.u32 1326507024, %v1189
      %v1205 = vor.u32 %v1203, %v1204
      %vm1206 = vcmp.lt.s32.totalorder %v1187, 1
      %vm1207 = vcmp.lt.s32.totalorder %v1187, 2
      %vm1208 = vcmp.lt.s32.totalorder %v1187, 3
      %vm1209 = vcmp.lt.s32.totalorder %v1187, 4
      %v1210 = vsel %vm1206, %v1190, %v1193
      %v1211 = vsel %vm1209, %v1199, 2102212464
      %v1212 = vsel %vm1208, %v1196, %v1211
      %v1213 = vsel %vm1207, %v1210, %v1212
      %v1214 = vsel %vm1206, %v1193, %v1196
      %v1215 = vsel %vm1209, %v1202, 920167782
      %v1216 = vsel %vm1208, %v1199, %v1215
      %v1217 = vsel %vm1207, %v1214, %v1216
      %v1218 = vsel %vm1206, %v1196, %v1199
      %v1219 = vsel %vm1209, %v1205, 1326507024
      %v1220 = vsel %vm1208, %v1202, %v1219
      %v1221 = vsel %vm1207, %v1218, %v1220
      %v1222 = vshll.u32 %v1182, 8
      %v1223 = vmul.u32.u64.compose %v1222, %v1221
      %v1224 = vextract.low.u32 %v1223
      %v1225 = vextract.high.u32 %v1223
      %v1226 = vmul.u32.u64.compose %v1222, %v1217
      %v1227 = vextract.low.u32 %v1226
      %v1228 = vextract.high.u32 %v1226
      %v1229 = vmul.u32 %v1222, %v1213
      %v1230 = vadd.s32 %v1225, %v1227
      %vm1231 = vc.u32 %v1225, %v1227
      %v1232 = vadd.s32 %v1228, 1
      %v1233 = vsel %vm1231, %v1232, %v1228
      %v1234 = vadd.s32 %v1229, %v1233
      %v1235 = vadd.s32 %v1234, 536870912
      %v1236 = vshrl.u32 %v1235, 30
      %v1237 = vshll.u32 %v1236, 30
      %v1238 = vsub.s32 %v1234, %v1237
      %vm1239 = vcmp.lt.s32.totalorder %v1238, 0
      %v1240 = vsub.s32 0, %v1238
      %v1241 = vsel %vm1239, %v1240, %v1238
      %v1242 = vclz %v1241
      %v1243 = vsub.s32 %v1242, 2
      %vm1244 = vcmp.gt.s32.totalorder 0, %v1243
      %v1245 = vsel %vm1244, 0, %v1243
      %v1246 = vsub.s32 32, %v1245
      %v1247 = vshll.u32 %v1238, %v1245
      %v1248 = vshrl.u32 %v1230, %v1246
      %v1249 = vor.u32 %v1247, %v1248
      %v1250 = vsub.s32 4294967266, %v1245
      %v1251 = vadd.s32 %v1250, 127
      %v1252 = vshll.u32 %v1251, 23
      %v1253 = vor.u32 4788187, %v1252
      %v1254 = vand.u32 2147483647, %v1253
      %v1256 = vcvt.s32.f32 %v1249
      %v1257 = vmul.f32 %v1256, %v1254
      %v1258 = vxor.u32 %v1257, 2147483648
      %v1259 = vsel %vm1176, %v1258, %v1257
      %v1260 = vsub.s32 4, %v1236
      %v1261 = vsel %vm1176, %v1260, %v1236
      %v1262 = vsel %vm1175, %v445, %v1259
      %v1263 = vsel %vm1175, 0, %v1261
      %v1264 = vcosq.f32.pop %v1262
      %v1265 = vsinq.f32.pop %v1262
      %vm1266 = vweird.f32 %v445
      %v1267 = vadd.s32 %v1263, 3
      %v1268 = vand.u32 %v1267, 3
      %vm1269 = vcmp.lt.s32.totalorder %v1268, 2
      %vm1270 = vcmp.eq.s32.totalorder %v1268, 0
      %v1271 = vxor.u32 %v1265, 2147483648
      %v1272 = vsel %vm1270, %v1264, %v1271
      %vm1273 = vcmp.eq.s32.totalorder %v1268, 2
      %v1274 = vxor.u32 %v1264, 2147483648
      %v1275 = vsel %vm1273, %v1274, %v1265
      %v1276 = vsel %vm1269, %v1272, %v1275
      %v1277 = vsel %vm1266, nan, %v1276
      %v1278 = vpack.c.bf16 %v757, %v549
      %v1279 = vpack.c.bf16 %v861, %v653
      %v1280 = vpack.c.bf16 %v1173, %v965
      %v1281 = vpack.c.bf16 %v1277, %v1069
      %1283 = vset.pattern.permute.xlu0 0
      %1284 = vperm.xlu0 %1283, %v259
      %v1285 = vpop.permute.xlu0 %1284
      %1288 = vset.pattern.permute.xlu0 0
      %1289 = vperm.xlu0 %1288, %v260
      %v1290 = vpop.permute.xlu0 %1289
      %1293 = vset.pattern.permute.xlu0 0
      %1294 = vperm.xlu0 %1293, %v261
      %v1295 = vpop.permute.xlu0 %1294
      %1298 = vset.pattern.permute.xlu0 0
      %1299 = vperm.xlu0 %1298, %v262
      %v1300 = vpop.permute.xlu0 %1299
      %1303 = vset.pattern.permute.xlu0 0
      %1304 = vperm.xlu0 %1303, %v263
      %v1305 = vpop.permute.xlu0 %1304
      %1308 = vset.pattern.permute.xlu0 0
      %1309 = vperm.xlu0 %1308, %v264
      %v1310 = vpop.permute.xlu0 %1309
      %1313 = vset.pattern.permute.xlu0 0
      %1314 = vperm.xlu0 %1313, %v265
      %v1315 = vpop.permute.xlu0 %1314
      %1318 = vset.pattern.permute.xlu0 0
      %1319 = vperm.xlu0 %1318, %v266
      %v1320 = vpop.permute.xlu0 %1319
      %v1330 = vunpack.c.l.b16 %v272
      %v1331 = vunpack.c.l.b16 %v273
      %v1332 = vunpack.c.l.b16 %v274
      %v1333 = vunpack.c.l.b16 %v275
      %v1334 = vunpack.c.l.b16 %v276
      %v1335 = vunpack.c.l.b16 %v277
      %v1336 = vunpack.c.l.b16 %v278
      %v1337 = vunpack.c.l.b16 %v279
      %v1338 = vpack.c.b16 %v1331, %v1330
      %v1339 = vpack.c.b16 %v1333, %v1332
      %v1340 = vpack.c.b16 %v1335, %v1334
      %v1341 = vpack.c.b16 %v1337, %v1336
      %vm1342 = vcmask 261120
      %v1344 = vsel %vm1342, %v1338, 0
      %v1347 = vsel %vm1342, %v1339, 0
      %v1350 = vsel %vm1342, %v1340, 0
      %v1353 = vsel %vm1342, %v1341, 0
      %1355 = vmatprep.subr.bf16.mxu0 %v1279
      %1356 = vmatpush1.bf16.msra.mxu0 %v1278
      %1357 = vmatprep.subr.bf16.mxu0 %v1281
      %1358 = vmatpush1.bf16.msra.mxu0 %v1280
      %1359 = vmatprep.subr.bf16.mxu0 0
      %1360 = vmatpush1.bf16.msra.mxu0 0
      %1361 = vmatprep.subr.bf16.mxu0 0
      %1362 = vmatpush1.bf16.msra.mxu0 0
      %1363 = vmatprep.subr.bf16.mxu0 0
      %1364 = vmatpush1.bf16.msra.mxu0 0
      %1365 = vmatprep.subr.bf16.mxu0 0
      %1366 = vmatpush1.bf16.msra.mxu0 0
      %1367 = vmatprep.subr.bf16.mxu0 0
      %1368 = vmatpush1.bf16.msra.mxu0 0
      %1369 = vmatprep.subr.bf16.mxu0 0
      %1370 = vmatpush1.bf16.msra.mxu0 0
      %1371 = vmatprep.subr.bf16.mxu0 0
      %1372 = vmatpush1.bf16.msra.mxu0 0
      %1373 = vmatprep.subr.bf16.mxu0 0
      %1374 = vmatpush1.bf16.msra.mxu0 0
      %1375 = vmatprep.subr.bf16.mxu0 0
      %1376 = vmatpush1.bf16.msra.mxu0 0
      %1377 = vmatprep.subr.bf16.mxu0 0
      %1378 = vmatpush1.bf16.msra.mxu0 0
      %1379 = vmatprep.subr.bf16.mxu0 0
      %1380 = vmatpush1.bf16.msra.mxu0 0
      %1381 = vmatprep.subr.bf16.mxu0 0
      %1382 = vmatpush1.bf16.msra.mxu0 0
      %1383 = vmatprep.subr.bf16.mxu0 0
      %1384 = vmatpush1.bf16.msra.mxu0 0
      %1385 = vmatprep.subr.bf16.mxu0 0
      %1386 = vmatpush1.bf16.msra.mxu0 0
      %1387 = vmatprep.mubr.bf16.mxu0 0
      %1388 = vmatmul.mubr.bf16.gmra.mrb[0].mxu0 %v1344
      %v1389 = vpop.f32.mrb[0].mxu0
      %v1390 = vadd.f32 %v1285, %v1389
      %v1391 = vpop.f32.mrb[0].mxu0
      %v1392 = vadd.f32 %v1285, %v1391
      %v1393 = vpop.f32.mrb[0].mxu0
      %v1394 = vadd.f32 %v1290, %v1393
      %v1395 = vpop.f32.mrb[0].mxu0
      %v1396 = vadd.f32 %v1290, %v1395
      %1397 = vmatprep.mubr.bf16.mxu0 0
      %1398 = vmatmul.mubr.bf16.gmra.mrb[0].mxu0 %v1347
      %v1399 = vpop.f32.mrb[0].mxu0
      %v1400 = vadd.f32 %v1295, %v1399
      %v1401 = vpop.f32.mrb[0].mxu0
      %v1402 = vadd.f32 %v1295, %v1401
      %v1403 = vpop.f32.mrb[0].mxu0
      %v1404 = vadd.f32 %v1300, %v1403
      %v1405 = vpop.f32.mrb[0].mxu0
      %v1406 = vadd.f32 %v1300, %v1405
      %1407 = vmatprep.mubr.bf16.mxu0 0
      %1408 = vmatmul.mubr.bf16.gmra.mrb[0].mxu0 %v1350
      %v1409 = vpop.f32.mrb[0].mxu0
      %v1410 = vadd.f32 %v1305, %v1409
      %v1411 = vpop.f32.mrb[0].mxu0
      %v1412 = vadd.f32 %v1305, %v1411
      %v1413 = vpop.f32.mrb[0].mxu0
      %v1414 = vadd.f32 %v1310, %v1413
      %v1415 = vpop.f32.mrb[0].mxu0
      %v1416 = vadd.f32 %v1310, %v1415
      %1417 = vmatprep.mubr.bf16.mxu0 0
      %1418 = vmatmul.mubr.bf16.gmra.mrb[0].mxu0 %v1353
      %v1419 = vpop.f32.mrb[0].mxu0
      %v1420 = vadd.f32 %v1315, %v1419
      %v1421 = vpop.f32.mrb[0].mxu0
      %v1422 = vadd.f32 %v1315, %v1421
      %v1423 = vpop.f32.mrb[0].mxu0
      %v1424 = vadd.f32 %v1320, %v1423
      %v1425 = vpop.f32.mrb[0].mxu0
      %v1426 = vadd.f32 %v1320, %v1425
      %1427 = vdwg.mxu0
      %v1428 = vmax.f32 %v1390, 0.0
      %v1429 = vmax.f32 %v1392, 0.0
      %v1430 = vmax.f32 %v1394, 0.0
      %v1431 = vmax.f32 %v1396, 0.0
      %v1432 = vmax.f32 %v1400, 0.0
      %v1433 = vmax.f32 %v1402, 0.0
      %v1434 = vmax.f32 %v1404, 0.0
      %v1435 = vmax.f32 %v1406, 0.0
      %v1436 = vmax.f32 %v1410, 0.0
      %v1437 = vmax.f32 %v1412, 0.0
      %v1438 = vmax.f32 %v1414, 0.0
      %v1439 = vmax.f32 %v1416, 0.0
      %v1440 = vmax.f32 %v1420, 0.0
      %v1441 = vmax.f32 %v1422, 0.0
      %v1442 = vmax.f32 %v1424, 0.0
      %v1443 = vmax.f32 %v1426, 0.0
      %v1444 = vpack.c.bf16 %v1430, %v1428
      %v1445 = vpack.c.bf16 %v1431, %v1429
      %v1446 = vpack.c.bf16 %v1434, %v1432
      %v1447 = vpack.c.bf16 %v1435, %v1433
      %v1448 = vpack.c.bf16 %v1438, %v1436
      %v1449 = vpack.c.bf16 %v1439, %v1437
      %v1450 = vpack.c.bf16 %v1442, %v1440
      %v1451 = vpack.c.bf16 %v1443, %v1441
      %1452 = vset.pattern.permute.xlu0 0
      %1453 = vperm.xlu0 %1452, %v296
      %v1454 = vpop.permute.xlu0 %1453
      %1456 = vset.pattern.permute.xlu0 0
      %1457 = vperm.xlu0 %1456, %v297
      %v1458 = vpop.permute.xlu0 %1457
      %1460 = vset.pattern.permute.xlu0 0
      %1461 = vperm.xlu0 %1460, %v298
      %v1462 = vpop.permute.xlu0 %1461
      %1464 = vset.pattern.permute.xlu0 0
      %1465 = vperm.xlu0 %1464, %v299
      %v1466 = vpop.permute.xlu0 %1465
      %1469 = vset.pattern.permute.xlu0 0
      %1470 = vperm.xlu0 %1469, %v300
      %v1471 = vpop.permute.xlu0 %1470
      %1474 = vset.pattern.permute.xlu0 0
      %1475 = vperm.xlu0 %1474, %v301
      %v1476 = vpop.permute.xlu0 %1475
      %1479 = vset.pattern.permute.xlu0 0
      %1480 = vperm.xlu0 %1479, %v302
      %v1481 = vpop.permute.xlu0 %1480
      %1484 = vset.pattern.permute.xlu0 0
      %1485 = vperm.xlu0 %1484, %v303
      %v1486 = vpop.permute.xlu0 %1485
      %v1496 = vunpack.c.l.b16 %v280
      %v1497 = vunpack.c.l.b16 %v281
      %v1498 = vunpack.c.l.b16 %v282
      %v1499 = vunpack.c.l.b16 %v283
      %v1500 = vunpack.c.l.b16 %v284
      %v1501 = vunpack.c.l.b16 %v285
      %v1502 = vunpack.c.l.b16 %v286
      %v1503 = vunpack.c.l.b16 %v287
      %v1504 = vpack.c.b16 %v1497, %v1496
      %v1505 = vpack.c.b16 %v1499, %v1498
      %v1506 = vpack.c.b16 %v1501, %v1500
      %v1507 = vpack.c.b16 %v1503, %v1502
      %vm1508 = vcmask 523264
      %v1510 = vsel %vm1508, %v1504, 0
      %v1513 = vsel %vm1508, %v1505, 0
      %v1516 = vsel %vm1508, %v1506, 0
      %v1519 = vsel %vm1508, %v1507, 0
      %1521 = vmatprep.subr.bf16.mxu0 %v1445
      %1522 = vmatpush1.bf16.msra.mxu0 %v1444
      %1523 = vmatprep.subr.bf16.mxu0 %v1447
      %1524 = vmatpush1.bf16.msra.mxu0 %v1446
      %1525 = vmatprep.subr.bf16.mxu0 %v1449
      %1526 = vmatpush1.bf16.msra.mxu0 %v1448
      %1527 = vmatprep.subr.bf16.mxu0 %v1451
      %1528 = vmatpush1.bf16.msra.mxu0 %v1450
      %1529 = vmatprep.subr.bf16.mxu0 0
      %1530 = vmatpush1.bf16.msra.mxu0 0
      %1531 = vmatprep.subr.bf16.mxu0 0
      %1532 = vmatpush1.bf16.msra.mxu0 0
      %1533 = vmatprep.subr.bf16.mxu0 0
      %1534 = vmatpush1.bf16.msra.mxu0 0
      %1535 = vmatprep.subr.bf16.mxu0 0
      %1536 = vmatpush1.bf16.msra.mxu0 0
      %1537 = vmatprep.subr.bf16.mxu0 0
      %1538 = vmatpush1.bf16.msra.mxu0 0
      %1539 = vmatprep.subr.bf16.mxu0 0
      %1540 = vmatpush1.bf16.msra.mxu0 0
      %1541 = vmatprep.subr.bf16.mxu0 0
      %1542 = vmatpush1.bf16.msra.mxu0 0
      %1543 = vmatprep.subr.bf16.mxu0 0
      %1544 = vmatpush1.bf16.msra.mxu0 0
      %1545 = vmatprep.subr.bf16.mxu0 0
      %1546 = vmatpush1.bf16.msra.mxu0 0
      %1547 = vmatprep.subr.bf16.mxu0 0
      %1548 = vmatpush1.bf16.msra.mxu0 0
      %1549 = vmatprep.subr.bf16.mxu0 0
      %1550 = vmatpush1.bf16.msra.mxu0 0
      %1551 = vmatprep.subr.bf16.mxu0 0
      %1552 = vmatpush1.bf16.msra.mxu0 0
      %1553 = vmatprep.mubr.bf16.mxu0 0
      %1554 = vmatmul.mubr.bf16.gmra.mrb[0].mxu0 %v1510
      %v1555 = vpop.f32.mrb[0].mxu0
      %v1556 = vadd.f32 %v1454, %v1555
      %v1557 = vpop.f32.mrb[0].mxu0
      %v1558 = vadd.f32 %v1454, %v1557
      %v1559 = vpop.f32.mrb[0].mxu0
      %v1560 = vadd.f32 %v1458, %v1559
      %v1561 = vpop.f32.mrb[0].mxu0
      %v1562 = vadd.f32 %v1458, %v1561
      %1563 = vmatprep.mubr.bf16.mxu0 0
      %1564 = vmatmul.mubr.bf16.gmra.mrb[0].mxu0 %v1513
      %v1565 = vpop.f32.mrb[0].mxu0
      %v1566 = vadd.f32 %v1462, %v1565
      %v1567 = vpop.f32.mrb[0].mxu0
      %v1568 = vadd.f32 %v1462, %v1567
      %v1569 = vpop.f32.mrb[0].mxu0
      %v1570 = vadd.f32 %v1466, %v1569
      %v1571 = vpop.f32.mrb[0].mxu0
      %v1572 = vadd.f32 %v1466, %v1571
      %1573 = vmatprep.mubr.bf16.mxu0 0
      %1574 = vmatmul.mubr.bf16.gmra.mrb[0].mxu0 %v1516
      %v1575 = vpop.f32.mrb[0].mxu0
      %v1576 = vadd.f32 %v1471, %v1575
      %v1577 = vpop.f32.mrb[0].mxu0
      %v1578 = vadd.f32 %v1471, %v1577
      %v1579 = vpop.f32.mrb[0].mxu0
      %v1580 = vadd.f32 %v1476, %v1579
      %v1581 = vpop.f32.mrb[0].mxu0
      %v1582 = vadd.f32 %v1476, %v1581
      %1583 = vmatprep.mubr.bf16.mxu0 0
      %1584 = vmatmul.mubr.bf16.gmra.mrb[0].mxu0 %v1519
      %v1585 = vpop.f32.mrb[0].mxu0
      %v1586 = vadd.f32 %v1481, %v1585
      %v1587 = vpop.f32.mrb[0].mxu0
      %v1588 = vadd.f32 %v1481, %v1587
      %v1589 = vpop.f32.mrb[0].mxu0
      %v1590 = vadd.f32 %v1486, %v1589
      %v1591 = vpop.f32.mrb[0].mxu0
      %v1592 = vadd.f32 %v1486, %v1591
      %1593 = vdwg.mxu0
      %v1594 = vmax.f32 %v1556, 0.0
      %v1595 = vmax.f32 %v1558, 0.0
      %v1596 = vmax.f32 %v1560, 0.0
      %v1597 = vmax.f32 %v1562, 0.0
      %v1598 = vmax.f32 %v1566, 0.0
      %v1599 = vmax.f32 %v1568, 0.0
      %v1600 = vmax.f32 %v1570, 0.0
      %v1601 = vmax.f32 %v1572, 0.0
      %v1602 = vmax.f32 %v1576, 0.0
      %v1603 = vmax.f32 %v1578, 0.0
      %v1604 = vmax.f32 %v1580, 0.0
      %v1605 = vmax.f32 %v1582, 0.0
      %v1606 = vmax.f32 %v1586, 0.0
      %v1607 = vmax.f32 %v1588, 0.0
      %v1608 = vmax.f32 %v1590, 0.0
      %v1609 = vmax.f32 %v1592, 0.0
      %v1610 = vpack.c.bf16 %v1596, %v1594
      %v1611 = vpack.c.bf16 %v1597, %v1595
      %v1612 = vpack.c.bf16 %v1600, %v1598
      %v1613 = vpack.c.bf16 %v1601, %v1599
      %v1614 = vpack.c.bf16 %v1604, %v1602
      %v1615 = vpack.c.bf16 %v1605, %v1603
      %v1616 = vpack.c.bf16 %v1608, %v1606
      %v1617 = vpack.c.bf16 %v1609, %v1607
      %1618 = vset.pattern.permute.xlu0 1
      %1619 = vperm.xlu0 %1618, %v296
      %v1620 = vpop.permute.xlu0 %1619
      %1622 = vset.pattern.permute.xlu0 1
      %1623 = vperm.xlu0 %1622, %v297
      %v1624 = vpop.permute.xlu0 %1623
      %1625 = vset.pattern.permute.xlu0 1
      %1626 = vperm.xlu0 %1625, %v298
      %v1627 = vpop.permute.xlu0 %1626
      %1628 = vset.pattern.permute.xlu0 1
      %1629 = vperm.xlu0 %1628, %v299
      %v1630 = vpop.permute.xlu0 %1629
      %1631 = vset.pattern.permute.xlu0 1
      %1632 = vperm.xlu0 %1631, %v300
      %v1633 = vpop.permute.xlu0 %1632
      %1634 = vset.pattern.permute.xlu0 1
      %1635 = vperm.xlu0 %1634, %v301
      %v1636 = vpop.permute.xlu0 %1635
      %1637 = vset.pattern.permute.xlu0 1
      %1638 = vperm.xlu0 %1637, %v302
      %v1639 = vpop.permute.xlu0 %1638
      %1640 = vset.pattern.permute.xlu0 1
      %1641 = vperm.xlu0 %1640, %v303
      %v1642 = vpop.permute.xlu0 %1641
      %v1651 = vunpack.c.l.b16 %v288
      %v1652 = vunpack.c.l.b16 %v289
      %v1653 = vunpack.c.l.b16 %v290
      %v1654 = vunpack.c.l.b16 %v291
      %v1655 = vunpack.c.l.b16 %v292
      %v1656 = vunpack.c.l.b16 %v293
      %v1657 = vunpack.c.l.b16 %v294
      %v1658 = vunpack.c.l.b16 %v295
      %v1659 = vpack.c.b16 %v1652, %v1651
      %v1660 = vpack.c.b16 %v1654, %v1653
      %v1661 = vpack.c.b16 %v1656, %v1655
      %v1662 = vpack.c.b16 %v1658, %v1657
      %v1664 = vsel %vm1508, %v1659, 0
      %v1667 = vsel %vm1508, %v1660, 0
      %v1670 = vsel %vm1508, %v1661, 0
      %v1673 = vsel %vm1508, %v1662, 0
      %1675 = vmatprep.subr.bf16.mxu0 %v1611
      %1676 = vmatpush1.bf16.msra.mxu0 %v1610
      %1677 = vmatprep.subr.bf16.mxu0 %v1613
      %1678 = vmatpush1.bf16.msra.mxu0 %v1612
      %1679 = vmatprep.subr.bf16.mxu0 %v1615
      %1680 = vmatpush1.bf16.msra.mxu0 %v1614
      %1681 = vmatprep.subr.bf16.mxu0 %v1617
      %1682 = vmatpush1.bf16.msra.mxu0 %v1616
      %1683 = vmatprep.subr.bf16.mxu0 0
      %1684 = vmatpush1.bf16.msra.mxu0 0
      %1685 = vmatprep.subr.bf16.mxu0 0
      %1686 = vmatpush1.bf16.msra.mxu0 0
      %1687 = vmatprep.subr.bf16.mxu0 0
      %1688 = vmatpush1.bf16.msra.mxu0 0
      %1689 = vmatprep.subr.bf16.mxu0 0
      %1690 = vmatpush1.bf16.msra.mxu0 0
      %1691 = vmatprep.subr.bf16.mxu0 0
      %1692 = vmatpush1.bf16.msra.mxu0 0
      %1693 = vmatprep.subr.bf16.mxu0 0
      %1694 = vmatpush1.bf16.msra.mxu0 0
      %1695 = vmatprep.subr.bf16.mxu0 0
      %1696 = vmatpush1.bf16.msra.mxu0 0
      %1697 = vmatprep.subr.bf16.mxu0 0
      %1698 = vmatpush1.bf16.msra.mxu0 0
      %1699 = vmatprep.subr.bf16.mxu0 0
      %1700 = vmatpush1.bf16.msra.mxu0 0
      %1701 = vmatprep.subr.bf16.mxu0 0
      %1702 = vmatpush1.bf16.msra.mxu0 0
      %1703 = vmatprep.subr.bf16.mxu0 0
      %1704 = vmatpush1.bf16.msra.mxu0 0
      %1705 = vmatprep.subr.bf16.mxu0 0
      %1706 = vmatpush1.bf16.msra.mxu0 0
      %1707 = vmatprep.mubr.bf16.mxu0 0
      %1708 = vmatmul.mubr.bf16.gmra.mrb[0].mxu0 %v1664
      %v1709 = vpop.f32.mrb[0].mxu0
      %v1710 = vadd.f32 %v1620, %v1709
      %v1711 = vpop.f32.mrb[0].mxu0
      %v1712 = vadd.f32 %v1620, %v1711
      %v1713 = vpop.f32.mrb[0].mxu0
      %v1714 = vpop.f32.mrb[0].mxu0
      %1715 = vmatprep.mubr.bf16.mxu0 0
      %1716 = vmatmul.mubr.bf16.gmra.mrb[0].mxu0 %v1667
      %v1717 = vpop.f32.mrb[0].mxu0
      %v1718 = vpop.f32.mrb[0].mxu0
      %v1719 = vpop.f32.mrb[0].mxu0
      %v1720 = vpop.f32.mrb[0].mxu0
      %1721 = vmatprep.mubr.bf16.mxu0 0
      %1722 = vmatmul.mubr.bf16.gmra.mrb[0].mxu0 %v1670
      %v1723 = vpop.f32.mrb[0].mxu0
      %v1724 = vpop.f32.mrb[0].mxu0
      %v1725 = vpop.f32.mrb[0].mxu0
      %v1726 = vpop.f32.mrb[0].mxu0
      %1727 = vmatprep.mubr.bf16.mxu0 0
      %1728 = vmatmul.mubr.bf16.gmra.mrb[0].mxu0 %v1673
      %v1729 = vpop.f32.mrb[0].mxu0
      %v1730 = vpop.f32.mrb[0].mxu0
      %v1731 = vpop.f32.mrb[0].mxu0
      %v1732 = vpop.f32.mrb[0].mxu0
      %1733 = vdwg.mxu0
      %v1734 = vtanh.pop %v1710
      %v1735 = vtanh.pop %v1712
      %v1738 = vcombine.low %v1734, %v1735
      %1740 = vst [vmem:[%s255] sm:$0x77] %v1738
      %s1741 = smul.u32 2, %s20
      %p1742 = scmp.lt.s32.totalorder %s19, 1
      %s1743 = scalar_select %p1742, %s19, 1
      %p1744 = scmp.lt.s32.totalorder %s1741, 1
      %s1745 = scalar_select %p1744, %s1741, 1
      %s1746 = smul.addr %s1743, 2
      %s1747 = sadd.s32 %s1745, %s1746
      %s1748 = smul.addr %s1747, 4
      %s1749 = scalar_lea.vmem %s4, %s1748
      // Predicated region
      $region37: #{texture_gen_forward.3} parent=35 // pred_check
        %p1750 = pneg %p143
      $region38: #{texture_gen_forward.3} parent=35 // pred_check_branch
        %1752 = sbr.rel (%p1750) target = $region40
      $region39: #{texture_gen_forward.3} parent=35 // pred_region
        %s1753 = smul.u32 2, %s20
      $region40: #{texture_gen_forward.3} parent=35 // pred_fallthru
        _
    $region36: #{texture_gen_forward.3} parent=5 // pred_fallthru
      _
    %p1754 = scmp.le.s32.totalorder 2, %s10
    // Predicated region
    $region41: #{texture_gen_forward.3} parent=5 // pred_check
      %p1755 = pneg %p1754
    $region42: #{texture_gen_forward.3} parent=5 // pred_check_branch
      %1757 = sbr.rel (%p1755) target = $region44
    $region43: #{texture_gen_forward.3} parent=5 // pred_region
      %s1758 = ssub.s32 %s10, 2
      // Predicated region
      $region45: #{texture_gen_forward.3} parent=43 // pred_check
        %p1759 = pneg %p149
      $region46: #{texture_gen_forward.3} parent=43 // pred_check_branch
        %1761 = sbr.rel (%p1759) target = $region48
      $region47: #{texture_gen_forward.3} parent=43 // pred_region
        %s1762 = smul.u32 2, %s22
        %p1763 = scmp.lt.s32.totalorder %s21, 1
        %s1764 = scalar_select %p1763, %s21, 1
        %p1765 = scmp.lt.s32.totalorder %s1762, 1
        %s1766 = scalar_select %p1765, %s1762, 1
        %s1767 = smul.addr %s1764, 2
        %s1768 = sadd.s32 %s1766, %s1767
        %s1769 = smul.addr %s1768, 4
        %s1770 = scalar_lea.vmem %s4, %s1769
      $region48: #{texture_gen_forward.3} parent=43 // pred_fallthru
        _
    $region44: #{texture_gen_forward.3} parent=5 // pred_fallthru
      _
  $region6: #{texture_gen_forward.3} parent=0 // loop_footer
    %s14 = sadd.s32 1, %s10
  $region7: #{texture_gen_forward.3} parent=0 // loop_footer_branch
    %9 = sbr.rel target = $region3
  $region8: #{texture_gen_forward.3} parent=0 // loop_exit
    _

// kernel: texture_gen_forward.2
$region0: #{texture_gen_forward.2}
  #allocation0 [shape = 'u32[]', space=smem, size = 0x4, offset = 0x4, fixed_abs, tag = 'smem constant byte address 0x4 - core index']
  #allocation1 [shape = 'u32[144,128]{1,0:T(1,128)}', space=vmem, size = 0x12000, scoped, tag = 'internal scratch']
  %s0 = inlined_call_operand.vmem [shape: f32[8,768], index: 0, kind: input, shape index: {}]
  %s1 = inlined_call_operand.vmem [shape: f32[8,16], index: 1, kind: input, shape index: {}]
  %s2 = inlined_call_operand.hbm [shape: bf16[768,128], index: 2, kind: input, shape index: {}]
  %s3 = inlined_call_operand.vmem [shape: f32[1,128], index: 3, kind: input, shape index: {}]
  %s4 = inlined_call_operand.vmem [shape: bf16[128,128], index: 4, kind: input, shape index: {}]
  %s5 = inlined_call_operand.vmem [shape: f32[1,128], index: 5, kind: input, shape index: {}]
  %s6 = inlined_call_operand.vmem [shape: bf16[8,64], index: 6, kind: input, shape index: {}]
  %s7 = inlined_call_operand.vmem [shape: f32[1,64], index: 7, kind: input, shape index: {}]
  %s8 = inlined_call_operand.vmem [shape: f32[8,128], index: 8, kind: output, shape index: {0}]
  %s9 = inlined_call_operand.vmem [shape: f32[8,128], index: 9, kind: output, shape index: {1}]
  %10 = xla_tuple %s8, %s9
  %s11 = sld [smem:[#allocation0]]
  $region54: #{texture_gen_forward.2} parent=0
    _
  %s13 = ssub.s32 1, %s11
  %s14 = scalar_select 0, %s13, %s11
  $region1: #{texture_gen_forward.2} parent=0
    #allocation2 [shape = 'u8[196608]{0}', space=vmem, size = 0x30000, scoped, tag = 'input window, operand 2, single buffered']
    #allocation3 [shape = 's32[1]{0}', space=sflag, size = 0x4, scoped, tag = 'scoped memory for texture_gen_forward.2']
    %15 = vsyncpa [#allocation3], 0
    // Predicated region
    $region2: #{texture_gen_forward.2} parent=1 // pred_check
      _
    $region3: #{texture_gen_forward.2} parent=1 // pred_check_branch
      %17 = sbr.rel (0) target = $region5
    $region4: #{texture_gen_forward.2} parent=1 // pred_region
      _
    $region5: #{texture_gen_forward.2} parent=1 // pred_fallthru
      _
    // Predicated region
    $region6: #{texture_gen_forward.2} parent=1 // pred_check
      _
    $region7: #{texture_gen_forward.2} parent=1 // pred_check_branch
      %19 = sbr.rel (0) target = $region9
    $region8: #{texture_gen_forward.2} parent=1 // pred_region
      _
    $region9: #{texture_gen_forward.2} parent=1 // pred_fallthru
      _
    // Predicated region
    $region10: #{texture_gen_forward.2} parent=1 // pred_check
      _
    $region11: #{texture_gen_forward.2} parent=1 // pred_check_branch
      %21 = sbr.rel (0) target = $region13
    $region12: #{texture_gen_forward.2} parent=1 // pred_region
      %s23 = ssub.s32 6144, 6144
      %24 = vsyncadd [#allocation3], %s23
      %s25 = sshll.u32 [#allocation2], 4
      %s26 = int_to_ptr.vmem [resolvable:$true] %s25
      %31 = dma.hbm_to_vmem [thread:$0]  %s2, 6144, %s26, [#allocation3], 64, 64, 4
    $region13: #{texture_gen_forward.2} parent=1 // pred_fallthru
      _
    // Predicated region
    $region14: #{texture_gen_forward.2} parent=1 // pred_check
      _
    $region15: #{texture_gen_forward.2} parent=1 // pred_check_branch
      %33 = sbr.rel (0) target = $region17
    $region16: #{texture_gen_forward.2} parent=1 // pred_region
      _
    $region17: #{texture_gen_forward.2} parent=1 // pred_fallthru
      _
    // Predicated region
    $region18: #{texture_gen_forward.2} parent=1 // pred_check
      _
    $region19: #{texture_gen_forward.2} parent=1 // pred_check_branch
      %35 = sbr.rel (0) target = $region21
    $region20: #{texture_gen_forward.2} parent=1 // pred_region
      _
    $region21: #{texture_gen_forward.2} parent=1 // pred_fallthru
      _
    // Predicated region
    $region22: #{texture_gen_forward.2} parent=1 // pred_check
      _
    $region23: #{texture_gen_forward.2} parent=1 // pred_check_branch
      %37 = sbr.rel (0) target = $region25
    $region24: #{texture_gen_forward.2} parent=1 // pred_region
      _
    $region25: #{texture_gen_forward.2} parent=1 // pred_fallthru
      _
    // Predicated region
    $region26: #{texture_gen_forward.2} parent=1 // pred_check
      _
    $region27: #{texture_gen_forward.2} parent=1 // pred_check_branch
      %39 = sbr.rel (0) target = $region29
    $region28: #{texture_gen_forward.2} parent=1 // pred_region
      _
    $region29: #{texture_gen_forward.2} parent=1 // pred_fallthru
      _
    // Predicated region
    $region30: #{texture_gen_forward.2} parent=1 // pred_check
      _
    $region31: #{texture_gen_forward.2} parent=1 // pred_check_branch
      %41 = sbr.rel (0) target = $region33
    $region32: #{texture_gen_forward.2} parent=1 // pred_region
      _
    $region33: #{texture_gen_forward.2} parent=1 // pred_fallthru
      _
    // Predicated region
    $region34: #{texture_gen_forward.2} parent=1 // pred_check
      _
    $region35: #{texture_gen_forward.2} parent=1 // pred_check_branch
      %43 = sbr.rel (0) target = $region37
    $region36: #{texture_gen_forward.2} parent=1 // pred_region
      %44 = dma.done [#allocation3], 6144
    $region37: #{texture_gen_forward.2} parent=1 // pred_fallthru
      _
    %v46 = vld [vmem:[%s0] sm:$0xff]
    %v47 = vld [vmem:[%s0 + $0x8] sm:$0xff]
    %v48 = vld [vmem:[%s0 + $0x10] sm:$0xff]
    %v49 = vld [vmem:[%s0 + $0x18] sm:$0xff]
    %v50 = vld [vmem:[%s0 + $0x20] sm:$0xff]
    %v51 = vld [vmem:[%s0 + $0x28] sm:$0xff]
    %v52 = vpack.c.bf16 %v46, %v46
    %v53 = vpack.c.bf16 %v47, %v47
    %v54 = vpack.c.bf16 %v48, %v48
    %v55 = vpack.c.bf16 %v49, %v49
    %v56 = vpack.c.bf16 %v50, %v50
    %v57 = vpack.c.bf16 %v51, %v51
    %v58 = vld [vmem:[#allocation2] sm:$0xf]
    %v59 = vld [vmem:[#allocation2 + $0x4] sm:$0xf]
    %v60 = vld [vmem:[#allocation2 + $0x8] sm:$0xf]
    %v61 = vld [vmem:[#allocation2 + $0xc] sm:$0xf]
    %v62 = vld [vmem:[#allocation2 + $0x10] sm:$0xf]
    %v63 = vld [vmem:[#allocation2 + $0x14] sm:$0xf]
    %v64 = vld [vmem:[#allocation2 + $0x18] sm:$0xf]
    %v65 = vld [vmem:[#allocation2 + $0x1c] sm:$0xf]
    %v66 = vld [vmem:[#allocation2 + $0x20] sm:$0xf]
    %v67 = vld [vmem:[#allocation2 + $0x24] sm:$0xf]
    %v68 = vld [vmem:[#allocation2 + $0x28] sm:$0xf]
    %v69 = vld [vmem:[#allocation2 + $0x2c] sm:$0xf]
    %v70 = vld [vmem:[#allocation2 + $0x30] sm:$0xf]
    %v71 = vld [vmem:[#allocation2 + $0x34] sm:$0xf]
    %v72 = vld [vmem:[#allocation2 + $0x38] sm:$0xf]
    %v73 = vld [vmem:[#allocation2 + $0x3c] sm:$0xf]
    %v74 = vld [vmem:[#allocation2 + $0x40] sm:$0xf]
    %v75 = vld [vmem:[#allocation2 + $0x44] sm:$0xf]
    %v76 = vld [vmem:[#allocation2 + $0x48] sm:$0xf]
    %v77 = vld [vmem:[#allocation2 + $0x4c] sm:$0xf]
    %v78 = vld [vmem:[#allocation2 + $0x50] sm:$0xf]
    %v79 = vld [vmem:[#allocation2 + $0x54] sm:$0xf]
    %v80 = vld [vmem:[#allocation2 + $0x58] sm:$0xf]
    %v81 = vld [vmem:[#allocation2 + $0x5c] sm:$0xf]
    %v82 = vld [vmem:[#allocation2 + $0x60] sm:$0xf]
    %v83 = vld [vmem:[#allocation2 + $0x64] sm:$0xf]
    %v84 = vld [vmem:[#allocation2 + $0x68] sm:$0xf]
    %v85 = vld [vmem:[#allocation2 + $0x6c] sm:$0xf]
    %v86 = vld [vmem:[#allocation2 + $0x70] sm:$0xf]
    %v87 = vld [vmem:[#allocation2 + $0x74] sm:$0xf]
    %v88 = vld [vmem:[#allocation2 + $0x78] sm:$0xf]
    %v89 = vld [vmem:[#allocation2 + $0x7c] sm:$0xf]
    %v90 = vld [vmem:[#allocation2 + $0x80] sm:$0xf]
    %v91 = vld [vmem:[#allocation2 + $0x84] sm:$0xf]
    %v92 = vld [vmem:[#allocation2 + $0x88] sm:$0xf]
    %v93 = vld [vmem:[#allocation2 + $0x8c] sm:$0xf]
    %v94 = vld [vmem:[#allocation2 + $0x90] sm:$0xf]
    %v95 = vld [vmem:[#allocation2 + $0x94] sm:$0xf]
    %v96 = vld [vmem:[#allocation2 + $0x98] sm:$0xf]
    %v97 = vld [vmem:[#allocation2 + $0x9c] sm:$0xf]
    %v98 = vld [vmem:[#allocation2 + $0xa0] sm:$0xf]
    %v99 = vld [vmem:[#allocation2 + $0xa4] sm:$0xf]
    %v100 = vld [vmem:[#allocation2 + $0xa8] sm:$0xf]
    %v101 = vld [vmem:[#allocation2 + $0xac] sm:$0xf]
    %v102 = vld [vmem:[#allocation2 + $0xb0] sm:$0xf]
    %v103 = vld [vmem:[#allocation2 + $0xb4] sm:$0xf]
    %v104 = vld [vmem:[#allocation2 + $0xb8] sm:$0xf]
    %v105 = vld [vmem:[#allocation2 + $0xbc] sm:$0xf]
    %v106 = vld [vmem:[#allocation2 + $0xc0] sm:$0xf]
    %v107 = vld [vmem:[#allocation2 + $0xc4] sm:$0xf]
    %v108 = vld [vmem:[#allocation2 + $0xc8] sm:$0xf]
    %v109 = vld [vmem:[#allocation2 + $0xcc] sm:$0xf]
    %v110 = vld [vmem:[#allocation2 + $0xd0] sm:$0xf]
    %v111 = vld [vmem:[#allocation2 + $0xd4] sm:$0xf]
    %v112 = vld [vmem:[#allocation2 + $0xd8] sm:$0xf]
    %v113 = vld [vmem:[#allocation2 + $0xdc] sm:$0xf]
    %v114 = vld [vmem:[#allocation2 + $0xe0] sm:$0xf]
    %v115 = vld [vmem:[#allocation2 + $0xe4] sm:$0xf]
    %v116 = vld [vmem:[#allocation2 + $0xe8] sm:$0xf]
    %v117 = vld [vmem:[#allocation2 + $0xec] sm:$0xf]
    %v118 = vld [vmem:[#allocation2 + $0xf0] sm:$0xf]
    %v119 = vld [vmem:[#allocation2 + $0xf4] sm:$0xf]
    %v120 = vld [vmem:[#allocation2 + $0xf8] sm:$0xf]
    %v121 = vld [vmem:[#allocation2 + $0xfc] sm:$0xf]
    %v122 = vld [vmem:[#allocation2 + $0x100] sm:$0xf]
    %v123 = vld [vmem:[#allocation2 + $0x104] sm:$0xf]
    %v124 = vld [vmem:[#allocation2 + $0x108] sm:$0xf]
    %v125 = vld [vmem:[#allocation2 + $0x10c] sm:$0xf]
    %v126 = vld [vmem:[#allocation2 + $0x110] sm:$0xf]
    %v127 = vld [vmem:[#allocation2 + $0x114] sm:$0xf]
    %v128 = vld [vmem:[#allocation2 + $0x118] sm:$0xf]
    %v129 = vld [vmem:[#allocation2 + $0x11c] sm:$0xf]
    %v130 = vld [vmem:[#allocation2 + $0x120] sm:$0xf]
    %v131 = vld [vmem:[#allocation2 + $0x124] sm:$0xf]
    %v132 = vld [vmem:[#allocation2 + $0x128] sm:$0xf]
    %v133 = vld [vmem:[#allocation2 + $0x12c] sm:$0xf]
    %v134 = vld [vmem:[#allocation2 + $0x130] sm:$0xf]
    %v135 = vld [vmem:[#allocation2 + $0x134] sm:$0xf]
    %v136 = vld [vmem:[#allocation2 + $0x138] sm:$0xf]
    %v137 = vld [vmem:[#allocation2 + $0x13c] sm:$0xf]
    %v138 = vld [vmem:[#allocation2 + $0x140] sm:$0xf]
    %v139 = vld [vmem:[#allocation2 + $0x144] sm:$0xf]
    %v140 = vld [vmem:[#allocation2 + $0x148] sm:$0xf]
    %v141 = vld [vmem:[#allocation2 + $0x14c] sm:$0xf]
    %v142 = vld [vmem:[#allocation2 + $0x150] sm:$0xf]
    %v143 = vld [vmem:[#allocation2 + $0x154] sm:$0xf]
    %v144 = vld [vmem:[#allocation2 + $0x158] sm:$0xf]
    %v145 = vld [vmem:[#allocation2 + $0x15c] sm:$0xf]
    %v146 = vld [vmem:[#allocation2 + $0x160] sm:$0xf]
    %v147 = vld [vmem:[#allocation2 + $0x164] sm:$0xf]
    %v148 = vld [vmem:[#allocation2 + $0x168] sm:$0xf]
    %v149 = vld [vmem:[#allocation2 + $0x16c] sm:$0xf]
    %v150 = vld [vmem:[#allocation2 + $0x170] sm:$0xf]
    %v151 = vld [vmem:[#allocation2 + $0x174] sm:$0xf]
    %v152 = vld [vmem:[#allocation2 + $0x178] sm:$0xf]
    %v153 = vld [vmem:[#allocation2 + $0x17c] sm:$0xf]
    %v154 = vld [vmem:[%s3] sm:$0x1]
    %v156 = vlaneseq
    %v157 = vshrl.u32 %v156, 7
    %v158 = vsub.s32 0, %v157
    %v159 = vrot.slane %v154, %v158
    %v257 = vunpack.c.l.b16 %v58
    %v258 = vunpack.c.l.b16 %v59
    %v259 = vunpack.c.l.b16 %v60
    %v260 = vunpack.c.l.b16 %v61
    %v261 = vunpack.c.l.b16 %v62
    %v262 = vunpack.c.l.b16 %v63
    %v263 = vunpack.c.l.b16 %v64
    %v264 = vunpack.c.l.b16 %v65
    %v265 = vunpack.c.l.b16 %v66
    %v266 = vunpack.c.l.b16 %v67
    %v267 = vunpack.c.l.b16 %v68
    %v268 = vunpack.c.l.b16 %v69
    %v269 = vunpack.c.l.b16 %v70
    %v270 = vunpack.c.l.b16 %v71
    %v271 = vunpack.c.l.b16 %v72
    %v272 = vunpack.c.l.b16 %v73
    %v273 = vunpack.c.l.b16 %v74
    %v274 = vunpack.c.l.b16 %v75
    %v275 = vunpack.c.l.b16 %v76
    %v276 = vunpack.c.l.b16 %v77
    %v277 = vunpack.c.l.b16 %v78
    %v278 = vunpack.c.l.b16 %v79
    %v279 = vunpack.c.l.b16 %v80
    %v280 = vunpack.c.l.b16 %v81
    %v281 = vunpack.c.l.b16 %v82
    %v282 = vunpack.c.l.b16 %v83
    %v283 = vunpack.c.l.b16 %v84
    %v284 = vunpack.c.l.b16 %v85
    %v285 = vunpack.c.l.b16 %v86
    %v286 = vunpack.c.l.b16 %v87
    %v287 = vunpack.c.l.b16 %v88
    %v288 = vunpack.c.l.b16 %v89
    %v289 = vunpack.c.l.b16 %v90
    %v290 = vunpack.c.l.b16 %v91
    %v291 = vunpack.c.l.b16 %v92
    %v292 = vunpack.c.l.b16 %v93
    %v293 = vunpack.c.l.b16 %v94
    %v294 = vunpack.c.l.b16 %v95
    %v295 = vunpack.c.l.b16 %v96
    %v296 = vunpack.c.l.b16 %v97
    %v297 = vunpack.c.l.b16 %v98
    %v298 = vunpack.c.l.b16 %v99
    %v299 = vunpack.c.l.b16 %v100
    %v300 = vunpack.c.l.b16 %v101
    %v301 = vunpack.c.l.b16 %v102
    %v302 = vunpack.c.l.b16 %v103
    %v303 = vunpack.c.l.b16 %v104
    %v304 = vunpack.c.l.b16 %v105
    %v305 = vunpack.c.l.b16 %v106
    %v306 = vunpack.c.l.b16 %v107
    %v307 = vunpack.c.l.b16 %v108
    %v308 = vunpack.c.l.b16 %v109
    %v309 = vunpack.c.l.b16 %v110
    %v310 = vunpack.c.l.b16 %v111
    %v311 = vunpack.c.l.b16 %v112
    %v312 = vunpack.c.l.b16 %v113
    %v313 = vunpack.c.l.b16 %v114
    %v314 = vunpack.c.l.b16 %v115
    %v315 = vunpack.c.l.b16 %v116
    %v316 = vunpack.c.l.b16 %v117
    %v317 = vunpack.c.l.b16 %v118
    %v318 = vunpack.c.l.b16 %v119
    %v319 = vunpack.c.l.b16 %v120
    %v320 = vunpack.c.l.b16 %v121
    %v321 = vunpack.c.l.b16 %v122
    %v322 = vunpack.c.l.b16 %v123
    %v323 = vunpack.c.l.b16 %v124
    %v324 = vunpack.c.l.b16 %v125
    %v325 = vunpack.c.l.b16 %v126
    %v326 = vunpack.c.l.b16 %v127
    %v327 = vunpack.c.l.b16 %v128
    %v328 = vunpack.c.l.b16 %v129
    %v329 = vunpack.c.l.b16 %v130
    %v330 = vunpack.c.l.b16 %v131
    %v331 = vunpack.c.l.b16 %v132
    %v332 = vunpack.c.l.b16 %v133
    %v333 = vunpack.c.l.b16 %v134
    %v334 = vunpack.c.l.b16 %v135
    %v335 = vunpack.c.l.b16 %v136
    %v336 = vunpack.c.l.b16 %v137
    %v337 = vunpack.c.l.b16 %v138
    %v338 = vunpack.c.l.b16 %v139
    %v339 = vunpack.c.l.b16 %v140
    %v340 = vunpack.c.l.b16 %v141
    %v341 = vunpack.c.l.b16 %v142
    %v342 = vunpack.c.l.b16 %v143
    %v343 = vunpack.c.l.b16 %v144
    %v344 = vunpack.c.l.b16 %v145
    %v345 = vunpack.c.l.b16 %v146
    %v346 = vunpack.c.l.b16 %v147
    %v347 = vunpack.c.l.b16 %v148
    %v348 = vunpack.c.l.b16 %v149
    %v349 = vunpack.c.l.b16 %v150
    %v350 = vunpack.c.l.b16 %v151
    %v351 = vunpack.c.l.b16 %v152
    %v352 = vunpack.c.l.b16 %v153
    %v353 = vpack.c.b16 %v258, %v257
    %v354 = vpack.c.b16 %v260, %v259
    %v355 = vpack.c.b16 %v262, %v261
    %v356 = vpack.c.b16 %v264, %v263
    %v357 = vpack.c.b16 %v266, %v265
    %v358 = vpack.c.b16 %v268, %v267
    %v359 = vpack.c.b16 %v270, %v269
    %v360 = vpack.c.b16 %v272, %v271
    %v361 = vpack.c.b16 %v274, %v273
    %v362 = vpack.c.b16 %v276, %v275
    %v363 = vpack.c.b16 %v278, %v277
    %v364 = vpack.c.b16 %v280, %v279
    %v365 = vpack.c.b16 %v282, %v281
    %v366 = vpack.c.b16 %v284, %v283
    %v367 = vpack.c.b16 %v286, %v285
    %v368 = vpack.c.b16 %v288, %v287
    %v369 = vpack.c.b16 %v290, %v289
    %v370 = vpack.c.b16 %v292, %v291
    %v371 = vpack.c.b16 %v294, %v293
    %v372 = vpack.c.b16 %v296, %v295
    %v373 = vpack.c.b16 %v298, %v297
    %v374 = vpack.c.b16 %v300, %v299
    %v375 = vpack.c.b16 %v302, %v301
    %v376 = vpack.c.b16 %v304, %v303
    %v377 = vpack.c.b16 %v306, %v305
    %v378 = vpack.c.b16 %v308, %v307
    %v379 = vpack.c.b16 %v310, %v309
    %v380 = vpack.c.b16 %v312, %v311
    %v381 = vpack.c.b16 %v314, %v313
    %v382 = vpack.c.b16 %v316, %v315
    %v383 = vpack.c.b16 %v318, %v317
    %v384 = vpack.c.b16 %v320, %v319
    %v385 = vpack.c.b16 %v322, %v321
    %v386 = vpack.c.b16 %v324, %v323
    %v387 = vpack.c.b16 %v326, %v325
    %v388 = vpack.c.b16 %v328, %v327
    %v389 = vpack.c.b16 %v330, %v329
    %v390 = vpack.c.b16 %v332, %v331
    %v391 = vpack.c.b16 %v334, %v333
    %v392 = vpack.c.b16 %v336, %v335
    %v393 = vpack.c.b16 %v338, %v337
    %v394 = vpack.c.b16 %v340, %v339
    %v395 = vpack.c.b16 %v342, %v341
    %v396 = vpack.c.b16 %v344, %v343
    %v397 = vpack.c.b16 %v346, %v345
    %v398 = vpack.c.b16 %v348, %v347
    %v399 = vpack.c.b16 %v350, %v349
    %v400 = vpack.c.b16 %v352, %v351
    %449 = vmatprep.subr.bf16.mxu0 0
    %450 = vmatpush1.bf16.msra.mxu0 %v353
    %451 = vmatprep.subr.bf16.mxu0 0
    %452 = vmatpush1.bf16.msra.mxu0 %v354
    %453 = vmatprep.subr.bf16.mxu0 0
    %454 = vmatpush1.bf16.msra.mxu0 %v355
    %455 = vmatprep.subr.bf16.mxu0 0
    %456 = vmatpush1.bf16.msra.mxu0 %v356
    %457 = vmatprep.subr.bf16.mxu0 0
    %458 = vmatpush1.bf16.msra.mxu0 %v357
    %459 = vmatprep.subr.bf16.mxu0 0
    %460 = vmatpush1.bf16.msra.mxu0 %v358
    %461 = vmatprep.subr.bf16.mxu0 0
    %462 = vmatpush1.bf16.msra.mxu0 %v359
    %463 = vmatprep.subr.bf16.mxu0 0
    %464 = vmatpush1.bf16.msra.mxu0 %v360
    %465 = vmatprep.subr.bf16.mxu0 0
    %466 = vmatpush1.bf16.msra.mxu0 %v361
    %467 = vmatprep.subr.bf16.mxu0 0
    %468 = vmatpush1.bf16.msra.mxu0 %v362
    %469 = vmatprep.subr.bf16.mxu0 0
    %470 = vmatpush1.bf16.msra.mxu0 %v363
    %471 = vmatprep.subr.bf16.mxu0 0
    %472 = vmatpush1.bf16.msra.mxu0 %v364
    %473 = vmatprep.subr.bf16.mxu0 0
    %474 = vmatpush1.bf16.msra.mxu0 %v365
    %475 = vmatprep.subr.bf16.mxu0 0
    %476 = vmatpush1.bf16.msra.mxu0 %v366
    %477 = vmatprep.subr.bf16.mxu0 0
    %478 = vmatpush1.bf16.msra.mxu0 %v367
    %479 = vmatprep.subr.bf16.mxu0 0
    %480 = vmatpush1.bf16.msra.mxu0 %v368
    %481 = vmatprep.mubr.bf16.mxu0 %v53
    %482 = vmatmul.mubr.bf16.gmra.mrb[0].mxu0 %v52
    %v483 = vpop.f32.mrb[0].mxu0
    %v484 = vadd.f32 %v159, %v483
    %v485 = vpop.f32.mrb[0].mxu0
    %v486 = vpop.f32.mrb[0].mxu0
    %v487 = vpop.f32.mrb[0].mxu0
    %488 = vdwg.mxu0
    %489 = vmatprep.subr.bf16.mxu0 0
    %490 = vmatpush1.bf16.msra.mxu0 %v369
    %491 = vmatprep.subr.bf16.mxu0 0
    %492 = vmatpush1.bf16.msra.mxu0 %v370
    %493 = vmatprep.subr.bf16.mxu0 0
    %494 = vmatpush1.bf16.msra.mxu0 %v371
    %495 = vmatprep.subr.bf16.mxu0 0
    %496 = vmatpush1.bf16.msra.mxu0 %v372
    %497 = vmatprep.subr.bf16.mxu0 0
    %498 = vmatpush1.bf16.msra.mxu0 %v373
    %499 = vmatprep.subr.bf16.mxu0 0
    %500 = vmatpush1.bf16.msra.mxu0 %v374
    %501 = vmatprep.subr.bf16.mxu0 0
    %502 = vmatpush1.bf16.msra.mxu0 %v375
    %503 = vmatprep.subr.bf16.mxu0 0
    %504 = vmatpush1.bf16.msra.mxu0 %v376
    %505 = vmatprep.subr.bf16.mxu0 0
    %506 = vmatpush1.bf16.msra.mxu0 %v377
    %507 = vmatprep.subr.bf16.mxu0 0
    %508 = vmatpush1.bf16.msra.mxu0 %v378
    %509 = vmatprep.subr.bf16.mxu0 0
    %510 = vmatpush1.bf16.msra.mxu0 %v379
    %511 = vmatprep.subr.bf16.mxu0 0
    %512 = vmatpush1.bf16.msra.mxu0 %v380
    %513 = vmatprep.subr.bf16.mxu0 0
    %514 = vmatpush1.bf16.msra.mxu0 %v381
    %515 = vmatprep.subr.bf16.mxu0 0
    %516 = vmatpush1.bf16.msra.mxu0 %v382
    %517 = vmatprep.subr.bf16.mxu0 0
    %518 = vmatpush1.bf16.msra.mxu0 %v383
    %519 = vmatprep.subr.bf16.mxu0 0
    %520 = vmatpush1.bf16.msra.mxu0 %v384
    %521 = vmatprep.mubr.bf16.mxu0 %v55
    %522 = vmatmul.mubr.bf16.gmra.mrb[0].mxu0 %v54
    %v523 = vpop.f32.mrb[0].mxu0
    %v524 = vadd.f32 %v484, %v523
    %v525 = vpop.f32.mrb[0].mxu0
    %v526 = vpop.f32.mrb[0].mxu0
    %v527 = vpop.f32.mrb[0].mxu0
    %528 = vdwg.mxu0
    %529 = vmatprep.subr.bf16.mxu0 0
    %530 = vmatpush1.bf16.msra.mxu0 %v385
    %531 = vmatprep.subr.bf16.mxu0 0
    %532 = vmatpush1.bf16.msra.mxu0 %v386
    %533 = vmatprep.subr.bf16.mxu0 0
    %534 = vmatpush1.bf16.msra.mxu0 %v387
    %535 = vmatprep.subr.bf16.mxu0 0
    %536 = vmatpush1.bf16.msra.mxu0 %v388
    %537 = vmatprep.subr.bf16.mxu0 0
    %538 = vmatpush1.bf16.msra.mxu0 %v389
    %539 = vmatprep.subr.bf16.mxu0 0
    %540 = vmatpush1.bf16.msra.mxu0 %v390
    %541 = vmatprep.subr.bf16.mxu0 0
    %542 = vmatpush1.bf16.msra.mxu0 %v391
    %543 = vmatprep.subr.bf16.mxu0 0
    %544 = vmatpush1.bf16.msra.mxu0 %v392
    %545 = vmatprep.subr.bf16.mxu0 0
    %546 = vmatpush1.bf16.msra.mxu0 %v393
    %547 = vmatprep.subr.bf16.mxu0 0
    %548 = vmatpush1.bf16.msra.mxu0 %v394
    %549 = vmatprep.subr.bf16.mxu0 0
    %550 = vmatpush1.bf16.msra.mxu0 %v395
    %551 = vmatprep.subr.bf16.mxu0 0
    %552 = vmatpush1.bf16.msra.mxu0 %v396
    %553 = vmatprep.subr.bf16.mxu0 0
    %554 = vmatpush1.bf16.msra.mxu0 %v397
    %555 = vmatprep.subr.bf16.mxu0 0
    %556 = vmatpush1.bf16.msra.mxu0 %v398
    %557 = vmatprep.subr.bf16.mxu0 0
    %558 = vmatpush1.bf16.msra.mxu0 %v399
    %559 = vmatprep.subr.bf16.mxu0 0
    %560 = vmatpush1.bf16.msra.mxu0 %v400
    %561 = vmatprep.mubr.bf16.mxu0 %v57
    %562 = vmatmul.mubr.bf16.gmra.mrb[0].mxu0 %v56
    %v563 = vpop.f32.mrb[0].mxu0
    %v564 = vadd.f32 %v524, %v563
    %v565 = vpop.f32.mrb[0].mxu0
    %v566 = vpop.f32.mrb[0].mxu0
    %v567 = vpop.f32.mrb[0].mxu0
    %568 = vdwg.mxu0
    %v569 = vmax.f32 %v564, 0.0
    %570 = vst [vmem:[%s8] sm:$0xff] %v569
    %v571 = vpack.c.bf16 %v569, %v569
    %v572 = vld [vmem:[%s4] sm:$0xf]
    %v573 = vld [vmem:[%s4 + $0x4] sm:$0xf]
    %v574 = vld [vmem:[%s4 + $0x8] sm:$0xf]
    %v575 = vld [vmem:[%s4 + $0xc] sm:$0xf]
    %v576 = vld [vmem:[%s4 + $0x10] sm:$0xf]
    %v577 = vld [vmem:[%s4 + $0x14] sm:$0xf]
    %v578 = vld [vmem:[%s4 + $0x18] sm:$0xf]
    %v579 = vld [vmem:[%s4 + $0x1c] sm:$0xf]
    %v580 = vld [vmem:[%s4 + $0x20] sm:$0xf]
    %v581 = vld [vmem:[%s4 + $0x24] sm:$0xf]
    %v582 = vld [vmem:[%s4 + $0x28] sm:$0xf]
    %v583 = vld [vmem:[%s4 + $0x2c] sm:$0xf]
    %v584 = vld [vmem:[%s4 + $0x30] sm:$0xf]
    %v585 = vld [vmem:[%s4 + $0x34] sm:$0xf]
    %v586 = vld [vmem:[%s4 + $0x38] sm:$0xf]
    %v587 = vld [vmem:[%s4 + $0x3c] sm:$0xf]
    %v588 = vld [vmem:[%s5] sm:$0x1]
    %v590 = vlaneseq
    %v591 = vshrl.u32 %v590, 7
    %v592 = vsub.s32 0, %v591
    %v593 = vrot.slane %v588, %v592
    %v611 = vunpack.c.l.b16 %v572
    %v612 = vunpack.c.l.b16 %v573
    %v613 = vunpack.c.l.b16 %v574
    %v614 = vunpack.c.l.b16 %v575
    %v615 = vunpack.c.l.b16 %v576
    %v616 = vunpack.c.l.b16 %v577
    %v617 = vunpack.c.l.b16 %v578
    %v618 = vunpack.c.l.b16 %v579
    %v619 = vunpack.c.l.b16 %v580
    %v620 = vunpack.c.l.b16 %v581
    %v621 = vunpack.c.l.b16 %v582
    %v622 = vunpack.c.l.b16 %v583
    %v623 = vunpack.c.l.b16 %v584
    %v624 = vunpack.c.l.b16 %v585
    %v625 = vunpack.c.l.b16 %v586
    %v626 = vunpack.c.l.b16 %v587
    %v627 = vpack.c.b16 %v612, %v611
    %v628 = vpack.c.b16 %v614, %v613
    %v629 = vpack.c.b16 %v616, %v615
    %v630 = vpack.c.b16 %v618, %v617
    %v631 = vpack.c.b16 %v620, %v619
    %v632 = vpack.c.b16 %v622, %v621
    %v633 = vpack.c.b16 %v624, %v623
    %v634 = vpack.c.b16 %v626, %v625
    %643 = vmatprep.subr.bf16.mxu0 0
    %644 = vmatpush1.bf16.msra.mxu0 %v627
    %645 = vmatprep.subr.bf16.mxu0 0
    %646 = vmatpush1.bf16.msra.mxu0 %v628
    %647 = vmatprep.subr.bf16.mxu0 0
    %648 = vmatpush1.bf16.msra.mxu0 %v629
    %649 = vmatprep.subr.bf16.mxu0 0
    %650 = vmatpush1.bf16.msra.mxu0 %v630
    %651 = vmatprep.subr.bf16.mxu0 0
    %652 = vmatpush1.bf16.msra.mxu0 %v631
    %653 = vmatprep.subr.bf16.mxu0 0
    %654 = vmatpush1.bf16.msra.mxu0 %v632
    %655 = vmatprep.subr.bf16.mxu0 0
    %656 = vmatpush1.bf16.msra.mxu0 %v633
    %657 = vmatprep.subr.bf16.mxu0 0
    %658 = vmatpush1.bf16.msra.mxu0 %v634
    %659 = vmatprep.subr.bf16.mxu0 0
    %660 = vmatpush1.bf16.msra.mxu0 0
    %661 = vmatprep.subr.bf16.mxu0 0
    %662 = vmatpush1.bf16.msra.mxu0 0
    %663 = vmatprep.subr.bf16.mxu0 0
    %664 = vmatpush1.bf16.msra.mxu0 0
    %665 = vmatprep.subr.bf16.mxu0 0
    %666 = vmatpush1.bf16.msra.mxu0 0
    %667 = vmatprep.subr.bf16.mxu0 0
    %668 = vmatpush1.bf16.msra.mxu0 0
    %669 = vmatprep.subr.bf16.mxu0 0
    %670 = vmatpush1.bf16.msra.mxu0 0
    %671 = vmatprep.subr.bf16.mxu0 0
    %672 = vmatpush1.bf16.msra.mxu0 0
    %673 = vmatprep.subr.bf16.mxu0 0
    %674 = vmatpush1.bf16.msra.mxu0 0
    %675 = vmatprep.mubr.bf16.mxu0 0
    %676 = vmatmul.mubr.bf16.gmra.mrb[0].mxu0 %v571
    %v677 = vpop.f32.mrb[0].mxu0
    %v678 = vadd.f32 %v593, %v677
    %v679 = vpop.f32.mrb[0].mxu0
    %v680 = vpop.f32.mrb[0].mxu0
    %v681 = vpop.f32.mrb[0].mxu0
    %682 = vdwg.mxu0
    %v683 = vpack.c.bf16 %v678, %v678
    %v684 = vld [vmem:[%s6] sm:$0xf]
    %v685 = vld [vmem:[%s7] sm:$0x1]
    %v687 = vlaneseq
    %v688 = vshrl.u32 %v687, 7
    %v689 = vsub.s32 0, %v688
    %v690 = vrot.slane %v685, %v689
    %693 = vrot.lane.b32.xlu0 %v683, 124
    %v694 = vpop.permute.xlu0 %693
    %vm695 = vcmask 64512
    %v697 = vsel %vm695, %v694, 0
    %vm699 = vcmask 1043456
    %v701 = vsel %vm699, %v684, 0
    %703 = vmatprep.subr.bf16.mxu0 0
    %704 = vmatpush1.bf16.msra.mxu0 %v701
    %705 = vmatprep.subr.bf16.mxu0 0
    %706 = vmatpush1.bf16.msra.mxu0 0
    %707 = vmatprep.subr.bf16.mxu0 0
    %708 = vmatpush1.bf16.msra.mxu0 0
    %709 = vmatprep.subr.bf16.mxu0 0
    %710 = vmatpush1.bf16.msra.mxu0 0
    %711 = vmatprep.subr.bf16.mxu0 0
    %712 = vmatpush1.bf16.msra.mxu0 0
    %713 = vmatprep.subr.bf16.mxu0 0
    %714 = vmatpush1.bf16.msra.mxu0 0
    %715 = vmatprep.subr.bf16.mxu0 0
    %716 = vmatpush1.bf16.msra.mxu0 0
    %717 = vmatprep.subr.bf16.mxu0 0
    %718 = vmatpush1.bf16.msra.mxu0 0
    %719 = vmatprep.subr.bf16.mxu0 0
    %720 = vmatpush1.bf16.msra.mxu0 0
    %721 = vmatprep.subr.bf16.mxu0 0
    %722 = vmatpush1.bf16.msra.mxu0 0
    %723 = vmatprep.subr.bf16.mxu0 0
    %724 = vmatpush1.bf16.msra.mxu0 0
    %725 = vmatprep.subr.bf16.mxu0 0
    %726 = vmatpush1.bf16.msra.mxu0 0
    %727 = vmatprep.subr.bf16.mxu0 0
    %728 = vmatpush1.bf16.msra.mxu0 0
    %729 = vmatprep.subr.bf16.mxu0 0
    %730 = vmatpush1.bf16.msra.mxu0 0
    %731 = vmatprep.subr.bf16.mxu0 0
    %732 = vmatpush1.bf16.msra.mxu0 0
    %733 = vmatprep.subr.bf16.mxu0 0
    %734 = vmatpush1.bf16.msra.mxu0 0
    %735 = vmatprep.mubr.bf16.mxu0 0
    %736 = vmatmul.mubr.bf16.gmra.mrb[0].mxu0 %v697
    %v737 = vpop.f32.mrb[0].mxu0
    %v738 = vadd.f32 %v690, %v737
    %v739 = vpop.f32.mrb[0].mxu0
    %v740 = vpop.f32.mrb[0].mxu0
    %v741 = vpop.f32.mrb[0].mxu0
    %742 = vdwg.mxu0
    %v743 = vld [vmem:[%s1] sm:$0xff]
    %744 = vst [vmem:[%s9] sm:$0xff] 0.0
    %vm745 = vcmask 523264
    %746 = vst.msk [vmem:[%s9] sm:$0xff] %vm745, %v738
    %v747 = vmul.f32 %v743, 1.7
    %749 = vrot.lane.b32.xlu0 %v747, 64
    %v750 = vpop.permute.xlu0 %749
    %vm752 = vcmask 654848
    %753 = vst.msk [vmem:[%s9] sm:$0xff] %vm752, %v750
    %v754 = vmul.f32 %v743, 2.3
    %v755 = vadd.f32 %v754, 1.5707964
    %757 = vrot.lane.b32.xlu0 %v755, 80
    %v758 = vpop.permute.xlu0 %757
    %vm760 = vcmask 786048
    %761 = vst.msk [vmem:[%s9] sm:$0xff] %vm760, %v758
    %763 = vrot.lane.b32.xlu0 %v678, 96
    %v764 = vpop.permute.xlu0 %763
    %vm766 = vcmask 818944
    %767 = vst.msk [vmem:[%s9] sm:$0xff] %vm766, %v764
    %768 = vrot.lane.b32.xlu0 %v678, 88
    %v769 = vpop.permute.xlu0 %768
    %vm771 = vcmask 851744
    %772 = vst.msk [vmem:[%s9] sm:$0xff] %vm771, %v769
    // Predicated region
    $region38: #{texture_gen_forward.2} parent=1 // pred_check
      _
    $region39: #{texture_gen_forward.2} parent=1 // pred_check_branch
      %774 = sbr.rel (0) target = $region41
    $region40: #{texture_gen_forward.2} parent=1 // pred_region
      _
    $region41: #{texture_gen_forward.2} parent=1 // pred_fallthru
      _
    // Predicated region
    $region42: #{texture_gen_forward.2} parent=1 // pred_check
      _
    $region43: #{texture_gen_forward.2} parent=1 // pred_check_branch
      %776 = sbr.rel (0) target = $region45
    $region44: #{texture_gen_forward.2} parent=1 // pred_region
      _
    $region45: #{texture_gen_forward.2} parent=1 // pred_fallthru
      _
    // Predicated region
    $region46: #{texture_gen_forward.2} parent=1 // pred_check
      _
    $region47: #{texture_gen_forward.2} parent=1 // pred_check_branch
      %778 = sbr.rel (0) target = $region49
    $region48: #{texture_gen_forward.2} parent=1 // pred_region
      _
    $region49: #{texture_gen_forward.2} parent=1 // pred_fallthru
      _
    // Predicated region
    $region50: #{texture_gen_forward.2} parent=1 // pred_check
      _
    $region51: #{texture_gen_forward.2} parent=1 // pred_check_branch
      %780 = sbr.rel (0) target = $region53
    $region52: #{texture_gen_forward.2} parent=1 // pred_region
      _
    $region53: #{texture_gen_forward.2} parent=1 // pred_fallthru
      _
    %781 = vsyncpa [#allocation3], 1

</llo_original>
